<compile_context>
chip_gen: v7x
topology: tpu7x:2x2x1
jax: 0.10.0
libtpu: 0.0.40
codegen_flags: <defaults>
</compile_context>

<pallas_src>
import numpy as np

import jax
import jax.numpy as jnp
from jax.experimental import pallas as pl
from jax.experimental.pallas import tpu as pltpu

# ----------------------------- model config ---------------------------------
KERNEL_SIZES = (1, 3, 5, 7)
KERNEL_SIZES_ASPECT = (1, 1, 2, 2)
KC_MAX = max(KERNEL_SIZES)          # 7
KA_MAX = max(KERNEL_SIZES_ASPECT)   # 2

B = 2             # batch
L = 16            # sequence length (context and aspect padded to same length)
EMBED_DIM = 32    # embedding_matrix dim
POS_TAG_DIM = 8   # pos_matrix dim
POSITION_DIM = 8  # opt.position_dim
C = 16            # opt.in_channels (per-stack conv out channels)
P = 3             # opt.polarities_dim
VOCAB = 20        # embedding_matrix rows
POS_VOCAB = 12    # pos_matrix rows
MAX_SEQ = L + 100 # opt.max_seq_len (+100 applied in __init__)

D_CTX = EMBED_DIM + POS_TAG_DIM + POSITION_DIM   # 48 (conv-context input dim)
D_ASP = EMBED_DIM + POS_TAG_DIM                  # 40 (conv-aspect input dim)
NSTACK = 2 * len(KERNEL_SIZES)                   # 8 stacks per side
CC = NSTACK * C                                  # 128 packed channels
CH = CC // 2                                     # 64 = channels of one "half"
LEAKY_SLOPE = 0.01                               # nn.LeakyReLU default


def _sigmoid(z):
    return 1.0 / (1.0 + jnp.exp(-z))


def _leaky(z):
    return jnp.where(z > 0, z, LEAKY_SLOPE * z)


# ------------------------------ fused kernel ---------------------------------
def make_fused_kernel(batch, seq_len, c_half, kc, ka):
    n = batch * seq_len

    def kernel(ctx_ref, asp_ref,
               w1c_ref, b1c_ref, w2c_ref, b2c_ref,
               w1a_ref, b1a_ref, w2a_ref, b2a_ref,
               wd_ref, bd_ref, o_ref):
        # Row index within its own sequence (for masking the causal shifts).
        row_in_seq = jax.lax.broadcasted_iota(jnp.int32, (n, 1), 0) % seq_len

        def shift_down(v, s):
            """v shifted down by s rows with zero fill, independently per
            length-`seq_len` sequence of the flattened (B*L, D) layout."""
            if s == 0:
                return v
            shifted = jnp.concatenate(
                [jnp.zeros((s, v.shape[1]), v.dtype), v[: n - s, :]], axis=0)
            return jnp.where(row_in_seq >= s, shifted, 0.0)

        def causal_conv(v, w_ref, b_ref, k):
            # im2col over lags -> single MXU matmul against the packed weight.
            if k == 1:
                cols = v
            else:
                cols = jnp.concatenate(
                    [shift_down(v, s) for s in range(k)], axis=-1)
            y = jnp.dot(cols, w_ref[...], preferred_element_type=jnp.float32)
            return y + b_ref[...]

        x_ctx = ctx_ref[...].astype(jnp.float32)   # (B*L, D_CTX)
        x_asp = asp_ref[...].astype(jnp.float32)   # (B*L, D_ASP)

        # Two stacked causal convs with LeakyReLU after each (cnn_layer),
        # all 8 context stacks / 8 aspect stacks packed along 128 lanes.
        h_c = _leaky(causal_conv(x_ctx, w1c_ref, b1c_ref, kc))   # (B*L, 128)
        y_c = _leaky(causal_conv(h_c, w2c_ref, b2c_ref, kc))     # (B*L, 128)
        h_a = _leaky(causal_conv(x_asp, w1a_ref, b1a_ref, ka))   # (B*L, 128)
        y_a = _leaky(causal_conv(h_a, w2a_ref, b2a_ref, ka))     # (B*L, 128)

        # Gating + global max-pool + dense head.  Channel layout:
        #   y_c = [c_0..c_3 | c'_0..c'_3],  y_a = [a_0..a_3 | a'_0..a'_3]
        feats = []
        for b in range(batch):
            lo = b * seq_len
            yc_b = y_c[lo:lo + seq_len, :]          # (L, 128)
            ya_b = y_a[lo:lo + seq_len, :]
            c = yc_b[:, :c_half]                     # (L, 64)
            c_ = yc_b[:, c_half:]
            a = ya_b[:, :c_half]
            a_ = ya_b[:, c_half:]
            ap = jnp.max(a, axis=0, keepdims=True)   # (1, 64) aspect pool
            cp = jnp.max(c, axis=0, keepdims=True)   # (1, 64) context pool
            s1 = c * _sigmoid(ap + c_)               # (L, 64)
            s2 = a * _sigmoid(cp + a_)
            r1 = jnp.max(s1, axis=0, keepdims=True)  # (1, 64) global max-pool
            r2 = jnp.max(s2, axis=0, keepdims=True)
            feats.append(jnp.concatenate([r1, r2], axis=-1))  # (1, 128)

        x = jnp.concatenate(feats, axis=0)           # (B, 128)
        out = jnp.dot(x, wd_ref[...], preferred_element_type=jnp.float32)
        out = out + bd_ref[...]
        o_ref[...] = out.astype(o_ref.dtype)

    return kernel


def _fused_pallas(ctx_flat, asp_flat, pk):
    batch = ctx_flat.shape[0] // L
    kernel = make_fused_kernel(batch, L, CH, KC_MAX, KA_MAX)
    args = (ctx_flat, asp_flat,
            pk["w1c"], pk["b1c"], pk["w2c"], pk["b2c"],
            pk["w1a"], pk["b1a"], pk["w2a"], pk["b2a"],
            pk["dense_w"], pk["dense_b"])
    in_specs = [pl.BlockSpec(a.shape, lambda i: (0, 0)) for a in args]
    return pl.pallas_call(
        kernel,
        out_shape=jax.ShapeDtypeStruct((batch, P), jnp.float32),
        grid=(1,),
        in_specs=in_specs,
        out_specs=pl.BlockSpec((batch, P), lambda i: (0, 0)),
        compiler_params=pltpu.CompilerParams(
            dimension_semantics=("arbitrary",)),
    )(*args)


# ------------------------------ forward pass ---------------------------------
@jax.jit
def gc_embed3_forward(packed, text_raw_indices, aspect_indices,
                      pos_indices, aspect_pos_indices, position_indices):
    emb = packed["embed"]                     # (VOCAB, EMBED_DIM)
    pos_emb = packed["pos_embed"]             # (POS_VOCAB, POS_TAG_DIM)
    position_emb = packed["position_embed"]   # (MAX_SEQ, POSITION_DIM)

    # Embedding gathers + concatenation stay in XLA (tiny, data-dependent).
    context = jnp.concatenate(
        [emb[text_raw_indices], pos_emb[pos_indices],
         position_emb[position_indices]], axis=-1)          # (B, L, D_CTX)
    aspect = jnp.concatenate(
        [emb[aspect_indices], pos_emb[aspect_pos_indices]], axis=-1)  # (B,L,D_ASP)

    bb, ll, dc = context.shape
    ctx_flat = context.reshape(bb * ll, dc)
    asp_flat = aspect.reshape(bb * ll, aspect.shape[-1])
    return _fused_pallas(ctx_flat, asp_flat, packed)


# ------------------------- weight packing (trace-free) ------------------------
def _pack_conv_group(stacks, ksizes, k_max, d_in, c):
    """Pack per-stack tap weights (k, d_in, c) into lag-ordered, lane-packed,
    im2col-flattened weights.  Layer-2 packed weight is block-diagonal."""
    n = len(stacks)
    w1 = np.zeros((k_max, d_in, n * c), np.float32)
    b1 = np.zeros((1, n * c), np.float32)
    w2 = np.zeros((k_max, n * c, n * c), np.float32)
    b2 = np.zeros((1, n * c), np.float32)
    for i, ((W1, B1, W2, B2), k) in enumerate(zip(stacks, ksizes)):
        W1 = np.asarray(W1); B1 = np.asarray(B1)
        W2 = np.asarray(W2); B2 = np.asarray(B2)
        lo = i * c
        for s in range(k):          # lag s corresponds to original tap k-1-s
            t = k - 1 - s
            w1[s, :, lo:lo + c] = W1[t]
            w2[s, lo:lo + c, lo:lo + c] = W2[t]
        b1[0, lo:lo + c] = B1.reshape(-1)
        b2[0, lo:lo + c] = B2.reshape(-1)
    return (jnp.asarray(w1.reshape(k_max * d_in, n * c)), jnp.asarray(b1),
            jnp.asarray(w2.reshape(k_max * n * c, n * c)), jnp.asarray(b2))


def pack_params(params):
    ctx_stacks = list(params["cnn_context"]) + list(params["cnn_context_"])
    ctx_ks = list(KERNEL_SIZES) * 2
    asp_stacks = list(params["cnn_aspect"]) + list(params["cnn_aspect_"])
    asp_ks = list(KERNEL_SIZES_ASPECT) * 2
    w1c, b1c, w2c, b2c = _pack_conv_group(ctx_stacks, ctx_ks, KC_MAX, D_CTX, C)
    w1a, b1a, w2a, b2a = _pack_conv_group(asp_stacks, asp_ks, KA_MAX, D_ASP, C)
    return {
        "embed": params["embed"],
        "pos_embed": params["pos_embed"],
        "position_embed": params["position_embed"],
        "w1c": w1c, "b1c": b1c, "w2c": w2c, "b2c": b2c,
        "w1a": w1a, "b1a": b1a, "w2a": w2a, "b2a": b2a,
        "dense_w": params["dense_w"], "dense_b": params["dense_b"],
    }


# ----------------------------- reference (JAX) --------------------------------
def ref_forward(params, text_raw_indices, aspect_indices,
                pos_indices, aspect_pos_indices, position_indices):
    emb = params["embed"]
    pos_emb = params["pos_embed"]
    position_emb = params["position_embed"]
    context = jnp.concatenate(
        [emb[text_raw_indices], pos_emb[pos_indices],
         position_emb[position_indices]], axis=-1)
    aspect = jnp.concatenate(
        [emb[aspect_indices], pos_emb[aspect_pos_indices]], axis=-1)

    def causal_conv(x, w, b, k):
        bb, ll, _ = x.shape
        xp = jnp.pad(x, ((0, 0), (k - 1, 0), (0, 0)))
        out = jnp.zeros((bb, ll, w.shape[-1]), jnp.float32) + b.reshape(1, 1, -1)
        for t in range(k):
            out = out + jnp.einsum("bld,dc->blc", xp[:, t:t + ll, :], w[t])
        return out

    def stack(x, sp, k):
        w1, b1, w2, b2 = sp
        h = _leaky(causal_conv(x, w1, b1, k))
        return _leaky(causal_conv(h, w2, b2, k))

    c = [stack(context, params["cnn_context"][i], k)
         for i, k in enumerate(KERNEL_SIZES)]
    c_ = [stack(context, params["cnn_context_"][i], k)
          for i, k in enumerate(KERNEL_SIZES)]
    a = [stack(aspect, params["cnn_aspect"][i], k)
         for i, k in enumerate(KERNEL_SIZES_ASPECT)]
    a_ = [stack(aspect, params["cnn_aspect_"][i], k)
          for i, k in enumerate(KERNEL_SIZES_ASPECT)]

    ap = [jnp.max(ai, axis=1, keepdims=True) for ai in a]   # aspect_pool
    cp = [jnp.max(ci, axis=1, keepdims=True) for ci in c]   # context_pool
    s1 = [ci * _sigmoid(api + ci_) for ci, ci_, api in zip(c, c_, ap)]
    s2 = [ai * _sigmoid(cpi + ai_) for ai, ai_, cpi in zip(a, a_, cp)]
    res1 = jnp.max(jnp.concatenate(s1, axis=-1), axis=1)    # (B, 4C)
    res2 = jnp.max(jnp.concatenate(s2, axis=-1), axis=1)
    x = jnp.concatenate([res1, res2], axis=-1)              # (B, 8C)
    return x @ params["dense_w"] + params["dense_b"]


# ------------------------------- param init ----------------------------------
def init_params(key):
    keys = iter(jax.random.split(key, 80))

    def nrm(shape, scale=0.1):
        return scale * jax.random.normal(next(keys), shape, jnp.float32)

    def stack_params(k, d_in):
        return (nrm((k, d_in, C)), nrm((1, C)), nrm((k, C, C)), nrm((1, C)))

    return {
        "embed": nrm((VOCAB, EMBED_DIM), 1.0),
        "pos_embed": nrm((POS_VOCAB, POS_TAG_DIM), 1.0),
        "position_embed": nrm((MAX_SEQ, POSITION_DIM), 1.0),
        "cnn_context": [stack_params(k, D_CTX) for k in KERNEL_SIZES],
        "cnn_context_": [stack_params(k, D_CTX) for k in KERNEL_SIZES],
        "cnn_aspect": [stack_params(k, D_ASP) for k in KERNEL_SIZES_ASPECT],
        "cnn_aspect_": [stack_params(k, D_ASP) for k in KERNEL_SIZES_ASPECT],
        "dense_w": nrm((2 * len(KERNEL_SIZES) * C, P)),
        "dense_b": nrm((1, P)),
    }


# ---------------------------------- main --------------------------------------
if __name__ == "__main__":
    root = jax.random.PRNGKey(0)
    k_par, k_txt, k_asp, k_pos, k_apos, k_posn = jax.random.split(root, 6)

    params = init_params(k_par)
    packed = pack_params(params)   # lag/lane packing done once, outside jit

    text_raw_indices = jax.random.randint(k_txt, (B, L), 1, VOCAB, jnp.int32)
    aspect_indices = jax.random.randint(k_asp, (B, L), 1, VOCAB, jnp.int32)
    pos_indices = jax.random.randint(k_pos, (B, L), 0, POS_VOCAB, jnp.int32)
    aspect_pos_indices = jax.random.randint(k_apos, (B, L), 0, POS_VOCAB,
                                            jnp.int32)
    position_indices = jax.random.randint(k_posn, (B, L), 0, MAX_SEQ, jnp.int32)

    out = gc_embed3_forward(packed, text_raw_indices, aspect_indices,
                            pos_indices, aspect_pos_indices, position_indices)
    out = jax.block_until_ready(out)
    assert out.shape == (B, P), out.shape

    ref = ref_forward(params, text_raw_indices, aspect_indices,
                      pos_indices, aspect_pos_indices, position_indices)
    max_err = float(jnp.max(jnp.abs(out - ref)))
    if not jnp.allclose(out, ref, atol=3e-2, rtol=3e-2):
        raise AssertionError(
            f"mismatch: pallas={out}\nref={ref}\nmax_abs_err={max_err}")

    print("KERNEL_OK")
</pallas_src>

<mosaic_0001>
module attributes {stable_mosaic.version = 11 : i64} {
  func.func @kernel(%arg0: i32, %arg1: memref<32x48xf32, #tpu.memory_space<vmem>>, %arg2: memref<32x40xf32, #tpu.memory_space<vmem>>, %arg3: memref<336x128xf32, #tpu.memory_space<vmem>>, %arg4: memref<1x128xf32, #tpu.memory_space<vmem>>, %arg5: memref<896x128xf32, #tpu.memory_space<vmem>>, %arg6: memref<1x128xf32, #tpu.memory_space<vmem>>, %arg7: memref<80x128xf32, #tpu.memory_space<vmem>>, %arg8: memref<1x128xf32, #tpu.memory_space<vmem>>, %arg9: memref<256x128xf32, #tpu.memory_space<vmem>>, %arg10: memref<1x128xf32, #tpu.memory_space<vmem>>, %arg11: memref<128x3xf32, #tpu.memory_space<vmem>>, %arg12: memref<1x3xf32, #tpu.memory_space<vmem>>, %arg13: memref<2x3xf32, #tpu.memory_space<vmem>>) attributes {dimension_semantics = [#tpu.dimension_semantics<arbitrary>], iteration_bounds = array<i64: 1>, scalar_prefetch = 0 : i64, scratch_operands = 0 : i64, tpu.core_type = #tpu.core_type<tc>, window_params = [{pipeline_mode = #tpu.pipeline_mode<synchronous>, transform_indices = @transform_0, window_bounds = array<i64: 32, 48>}, {pipeline_mode = #tpu.pipeline_mode<synchronous>, transform_indices = @transform_1, window_bounds = array<i64: 32, 40>}, {pipeline_mode = #tpu.pipeline_mode<synchronous>, transform_indices = @transform_2, window_bounds = array<i64: 336, 128>}, {pipeline_mode = #tpu.pipeline_mode<synchronous>, transform_indices = @transform_3, window_bounds = array<i64: 1, 128>}, {pipeline_mode = #tpu.pipeline_mode<synchronous>, transform_indices = @transform_4, window_bounds = array<i64: 896, 128>}, {pipeline_mode = #tpu.pipeline_mode<synchronous>, transform_indices = @transform_5, window_bounds = array<i64: 1, 128>}, {pipeline_mode = #tpu.pipeline_mode<synchronous>, transform_indices = @transform_6, window_bounds = array<i64: 80, 128>}, {pipeline_mode = #tpu.pipeline_mode<synchronous>, transform_indices = @transform_7, window_bounds = array<i64: 1, 128>}, {pipeline_mode = #tpu.pipeline_mode<synchronous>, transform_indices = @transform_8, window_bounds = array<i64: 256, 128>}, {pipeline_mode = #tpu.pipeline_mode<synchronous>, transform_indices = @transform_9, window_bounds = array<i64: 1, 128>}, {pipeline_mode = #tpu.pipeline_mode<synchronous>, transform_indices = @transform_10, window_bounds = array<i64: 128, 3>}, {pipeline_mode = #tpu.pipeline_mode<synchronous>, transform_indices = @transform_11, window_bounds = array<i64: 1, 3>}, {pipeline_mode = #tpu.pipeline_mode<synchronous>, transform_indices = @transform_12, window_bounds = array<i64: 2, 3>}]} {
    %0 = tpu.iota {dimensions = array<i32: 0>} : vector<32x1xi32>
    %c16_i32 = arith.constant 16 : i32
    %c0_i32 = arith.constant 0 : i32
    %1 = arith.cmpi eq, %c16_i32, %c0_i32 : i32
    %c1_i32 = arith.constant 1 : i32
    %2 = arith.select %1, %c1_i32, %c16_i32 : i32
    %3 = vector.broadcast %2 : i32 to vector<32x1xi32>
    %4 = arith.remsi %0, %3 : vector<32x1xi32>
    %c0_i32_0 = arith.constant 0 : i32
    %5 = vector.broadcast %c0_i32_0 : i32 to vector<32x1xi32>
    %6 = arith.cmpi ne, %4, %5 : vector<32x1xi32>
    %c0_i32_1 = arith.constant 0 : i32
    %7 = vector.broadcast %c0_i32_1 : i32 to vector<32x1xi32>
    %8 = arith.cmpi slt, %4, %7 : vector<32x1xi32>
    %c0_i32_2 = arith.constant 0 : i32
    %9 = arith.cmpi slt, %2, %c0_i32_2 : i32
    %10 = vector.broadcast %9 : i1 to vector<32x1xi1>
    %11 = vector.broadcast %10 : vector<32x1xi1> to vector<32x1xi1>
    %12 = arith.xori %8, %11 : vector<32x1xi1>
    %13 = arith.andi %12, %6 : vector<32x1xi1>
    %14 = vector.broadcast %2 : i32 to vector<32x1xi32>
    %15 = arith.addi %4, %14 : vector<32x1xi32>
    %16 = arith.select %13, %15, %4 : vector<32x1xi1>, vector<32x1xi32>
    %c0 = arith.constant 0 : index
    %c0_3 = arith.constant 0 : index
    %17 = vector.load %arg1[%c0, %c0_3] : memref<32x48xf32, #tpu.memory_space<vmem>>, vector<32x48xf32>
    %c0_4 = arith.constant 0 : index
    %c0_5 = arith.constant 0 : index
    %18 = vector.load %arg2[%c0_4, %c0_5] : memref<32x40xf32, #tpu.memory_space<vmem>>, vector<32x40xf32>
    %cst = arith.constant 0.000000e+00 : f32
    %19 = vector.broadcast %cst : f32 to vector<1x48xf32>
    %20 = vector.extract_strided_slice %17 {offsets = [0, 0], sizes = [31, 48], strides = [1, 1]} : vector<32x48xf32> to vector<31x48xf32>
    %21 = tpu.concatenate %19, %20 in 0 : vector<1x48xf32>, vector<31x48xf32> -> vector<32x48xf32>
    %c1_i32_6 = arith.constant 1 : i32
    %22 = vector.broadcast %c1_i32_6 : i32 to vector<32x1xi32>
    %23 = arith.cmpi sge, %16, %22 : vector<32x1xi32>
    %cst_7 = arith.constant 0.000000e+00 : f32
    %24 = vector.shape_cast %23 : vector<32x1xi1> to vector<32x1xi1>
    %25 = vector.broadcast %24 : vector<32x1xi1> to vector<32x48xi1>
    %26 = vector.broadcast %cst_7 : f32 to vector<32x48xf32>
    %27 = arith.select %25, %21, %26 : vector<32x48xi1>, vector<32x48xf32>
    %cst_8 = arith.constant 0.000000e+00 : f32
    %28 = vector.broadcast %cst_8 : f32 to vector<2x48xf32>
    %29 = vector.extract_strided_slice %17 {offsets = [0, 0], sizes = [30, 48], strides = [1, 1]} : vector<32x48xf32> to vector<30x48xf32>
    %30 = tpu.concatenate %28, %29 in 0 : vector<2x48xf32>, vector<30x48xf32> -> vector<32x48xf32>
    %c2_i32 = arith.constant 2 : i32
    %31 = vector.broadcast %c2_i32 : i32 to vector<32x1xi32>
    %32 = arith.cmpi sge, %16, %31 : vector<32x1xi32>
    %cst_9 = arith.constant 0.000000e+00 : f32
    %33 = vector.shape_cast %32 : vector<32x1xi1> to vector<32x1xi1>
    %34 = vector.broadcast %33 : vector<32x1xi1> to vector<32x48xi1>
    %35 = vector.broadcast %cst_9 : f32 to vector<32x48xf32>
    %36 = arith.select %34, %30, %35 : vector<32x48xi1>, vector<32x48xf32>
    %cst_10 = arith.constant 0.000000e+00 : f32
    %37 = vector.broadcast %cst_10 : f32 to vector<3x48xf32>
    %38 = vector.extract_strided_slice %17 {offsets = [0, 0], sizes = [29, 48], strides = [1, 1]} : vector<32x48xf32> to vector<29x48xf32>
    %39 = tpu.concatenate %37, %38 in 0 : vector<3x48xf32>, vector<29x48xf32> -> vector<32x48xf32>
    %c3_i32 = arith.constant 3 : i32
    %40 = vector.broadcast %c3_i32 : i32 to vector<32x1xi32>
    %41 = arith.cmpi sge, %16, %40 : vector<32x1xi32>
    %cst_11 = arith.constant 0.000000e+00 : f32
    %42 = vector.shape_cast %41 : vector<32x1xi1> to vector<32x1xi1>
    %43 = vector.broadcast %42 : vector<32x1xi1> to vector<32x48xi1>
    %44 = vector.broadcast %cst_11 : f32 to vector<32x48xf32>
    %45 = arith.select %43, %39, %44 : vector<32x48xi1>, vector<32x48xf32>
    %cst_12 = arith.constant 0.000000e+00 : f32
    %46 = vector.broadcast %cst_12 : f32 to vector<4x48xf32>
    %47 = vector.extract_strided_slice %17 {offsets = [0, 0], sizes = [28, 48], strides = [1, 1]} : vector<32x48xf32> to vector<28x48xf32>
    %48 = tpu.concatenate %46, %47 in 0 : vector<4x48xf32>, vector<28x48xf32> -> vector<32x48xf32>
    %c4_i32 = arith.constant 4 : i32
    %49 = vector.broadcast %c4_i32 : i32 to vector<32x1xi32>
    %50 = arith.cmpi sge, %16, %49 : vector<32x1xi32>
    %cst_13 = arith.constant 0.000000e+00 : f32
    %51 = vector.shape_cast %50 : vector<32x1xi1> to vector<32x1xi1>
    %52 = vector.broadcast %51 : vector<32x1xi1> to vector<32x48xi1>
    %53 = vector.broadcast %cst_13 : f32 to vector<32x48xf32>
    %54 = arith.select %52, %48, %53 : vector<32x48xi1>, vector<32x48xf32>
    %cst_14 = arith.constant 0.000000e+00 : f32
    %55 = vector.broadcast %cst_14 : f32 to vector<5x48xf32>
    %56 = vector.extract_strided_slice %17 {offsets = [0, 0], sizes = [27, 48], strides = [1, 1]} : vector<32x48xf32> to vector<27x48xf32>
    %57 = tpu.concatenate %55, %56 in 0 : vector<5x48xf32>, vector<27x48xf32> -> vector<32x48xf32>
    %c5_i32 = arith.constant 5 : i32
    %58 = vector.broadcast %c5_i32 : i32 to vector<32x1xi32>
    %59 = arith.cmpi sge, %16, %58 : vector<32x1xi32>
    %cst_15 = arith.constant 0.000000e+00 : f32
    %60 = vector.shape_cast %59 : vector<32x1xi1> to vector<32x1xi1>
    %61 = vector.broadcast %60 : vector<32x1xi1> to vector<32x48xi1>
    %62 = vector.broadcast %cst_15 : f32 to vector<32x48xf32>
    %63 = arith.select %61, %57, %62 : vector<32x48xi1>, vector<32x48xf32>
    %cst_16 = arith.constant 0.000000e+00 : f32
    %64 = vector.broadcast %cst_16 : f32 to vector<6x48xf32>
    %65 = vector.extract_strided_slice %17 {offsets = [0, 0], sizes = [26, 48], strides = [1, 1]} : vector<32x48xf32> to vector<26x48xf32>
    %66 = tpu.concatenate %64, %65 in 0 : vector<6x48xf32>, vector<26x48xf32> -> vector<32x48xf32>
    %c6_i32 = arith.constant 6 : i32
    %67 = vector.broadcast %c6_i32 : i32 to vector<32x1xi32>
    %68 = arith.cmpi sge, %16, %67 : vector<32x1xi32>
    %cst_17 = arith.constant 0.000000e+00 : f32
    %69 = vector.shape_cast %68 : vector<32x1xi1> to vector<32x1xi1>
    %70 = vector.broadcast %69 : vector<32x1xi1> to vector<32x48xi1>
    %71 = vector.broadcast %cst_17 : f32 to vector<32x48xf32>
    %72 = arith.select %70, %66, %71 : vector<32x48xi1>, vector<32x48xf32>
    %73 = tpu.concatenate %17, %27, %36, %45, %54, %63, %72 in 1 : vector<32x48xf32>, vector<32x48xf32>, vector<32x48xf32>, vector<32x48xf32>, vector<32x48xf32>, vector<32x48xf32>, vector<32x48xf32> -> vector<32x336xf32>
    %c0_18 = arith.constant 0 : index
    %c0_19 = arith.constant 0 : index
    %74 = vector.load %arg3[%c0_18, %c0_19] : memref<336x128xf32, #tpu.memory_space<vmem>>, vector<336x128xf32>
    %cst_20 = arith.constant dense<0.000000e+00> : vector<32x128xf32>
    %75 = tpu.matmul %73, %74, %cst_20 {dimension_numbers = #tpu.dot_dimension_numbers<[1], [0], [0], [1], [0, 0, 1, 1], [], []>} : vector<32x336xf32>, vector<336x128xf32>, vector<32x128xf32> -> vector<32x128xf32>
    %c0_21 = arith.constant 0 : index
    %c0_22 = arith.constant 0 : index
    %76 = vector.load %arg4[%c0_21, %c0_22] : memref<1x128xf32, #tpu.memory_space<vmem>>, vector<1x128xf32>
    %77 = vector.broadcast %76 : vector<1x128xf32> to vector<32x128xf32>
    %78 = arith.addf %75, %77 : vector<32x128xf32>
    %cst_23 = arith.constant 0.000000e+00 : f32
    %79 = vector.broadcast %cst_23 : f32 to vector<32x128xf32>
    %80 = arith.cmpf ogt, %78, %79 : vector<32x128xf32>
    %cst_24 = arith.constant 0.00999999977 : f32
    %81 = vector.broadcast %cst_24 : f32 to vector<32x128xf32>
    %82 = arith.mulf %81, %78 : vector<32x128xf32>
    %83 = arith.select %80, %78, %82 : vector<32x128xi1>, vector<32x128xf32>
    %cst_25 = arith.constant 0.000000e+00 : f32
    %84 = vector.broadcast %cst_25 : f32 to vector<1x128xf32>
    %85 = vector.extract_strided_slice %83 {offsets = [0, 0], sizes = [31, 128], strides = [1, 1]} : vector<32x128xf32> to vector<31x128xf32>
    %86 = tpu.concatenate %84, %85 in 0 : vector<1x128xf32>, vector<31x128xf32> -> vector<32x128xf32>
    %c1_i32_26 = arith.constant 1 : i32
    %87 = vector.broadcast %c1_i32_26 : i32 to vector<32x1xi32>
    %88 = arith.cmpi sge, %16, %87 : vector<32x1xi32>
    %cst_27 = arith.constant 0.000000e+00 : f32
    %89 = vector.shape_cast %88 : vector<32x1xi1> to vector<32x1xi1>
    %90 = vector.broadcast %89 : vector<32x1xi1> to vector<32x128xi1>
    %91 = vector.broadcast %cst_27 : f32 to vector<32x128xf32>
    %92 = arith.select %90, %86, %91 : vector<32x128xi1>, vector<32x128xf32>
    %cst_28 = arith.constant 0.000000e+00 : f32
    %93 = vector.broadcast %cst_28 : f32 to vector<2x128xf32>
    %94 = vector.extract_strided_slice %83 {offsets = [0, 0], sizes = [30, 128], strides = [1, 1]} : vector<32x128xf32> to vector<30x128xf32>
    %95 = tpu.concatenate %93, %94 in 0 : vector<2x128xf32>, vector<30x128xf32> -> vector<32x128xf32>
    %c2_i32_29 = arith.constant 2 : i32
    %96 = vector.broadcast %c2_i32_29 : i32 to vector<32x1xi32>
    %97 = arith.cmpi sge, %16, %96 : vector<32x1xi32>
    %cst_30 = arith.constant 0.000000e+00 : f32
    %98 = vector.shape_cast %97 : vector<32x1xi1> to vector<32x1xi1>
    %99 = vector.broadcast %98 : vector<32x1xi1> to vector<32x128xi1>
    %100 = vector.broadcast %cst_30 : f32 to vector<32x128xf32>
    %101 = arith.select %99, %95, %100 : vector<32x128xi1>, vector<32x128xf32>
    %cst_31 = arith.constant 0.000000e+00 : f32
    %102 = vector.broadcast %cst_31 : f32 to vector<3x128xf32>
    %103 = vector.extract_strided_slice %83 {offsets = [0, 0], sizes = [29, 128], strides = [1, 1]} : vector<32x128xf32> to vector<29x128xf32>
    %104 = tpu.concatenate %102, %103 in 0 : vector<3x128xf32>, vector<29x128xf32> -> vector<32x128xf32>
    %c3_i32_32 = arith.constant 3 : i32
    %105 = vector.broadcast %c3_i32_32 : i32 to vector<32x1xi32>
    %106 = arith.cmpi sge, %16, %105 : vector<32x1xi32>
    %cst_33 = arith.constant 0.000000e+00 : f32
    %107 = vector.shape_cast %106 : vector<32x1xi1> to vector<32x1xi1>
    %108 = vector.broadcast %107 : vector<32x1xi1> to vector<32x128xi1>
    %109 = vector.broadcast %cst_33 : f32 to vector<32x128xf32>
    %110 = arith.select %108, %104, %109 : vector<32x128xi1>, vector<32x128xf32>
    %cst_34 = arith.constant 0.000000e+00 : f32
    %111 = vector.broadcast %cst_34 : f32 to vector<4x128xf32>
    %112 = vector.extract_strided_slice %83 {offsets = [0, 0], sizes = [28, 128], strides = [1, 1]} : vector<32x128xf32> to vector<28x128xf32>
    %113 = tpu.concatenate %111, %112 in 0 : vector<4x128xf32>, vector<28x128xf32> -> vector<32x128xf32>
    %c4_i32_35 = arith.constant 4 : i32
    %114 = vector.broadcast %c4_i32_35 : i32 to vector<32x1xi32>
    %115 = arith.cmpi sge, %16, %114 : vector<32x1xi32>
    %cst_36 = arith.constant 0.000000e+00 : f32
    %116 = vector.shape_cast %115 : vector<32x1xi1> to vector<32x1xi1>
    %117 = vector.broadcast %116 : vector<32x1xi1> to vector<32x128xi1>
    %118 = vector.broadcast %cst_36 : f32 to vector<32x128xf32>
    %119 = arith.select %117, %113, %118 : vector<32x128xi1>, vector<32x128xf32>
    %cst_37 = arith.constant 0.000000e+00 : f32
    %120 = vector.broadcast %cst_37 : f32 to vector<5x128xf32>
    %121 = vector.extract_strided_slice %83 {offsets = [0, 0], sizes = [27, 128], strides = [1, 1]} : vector<32x128xf32> to vector<27x128xf32>
    %122 = tpu.concatenate %120, %121 in 0 : vector<5x128xf32>, vector<27x128xf32> -> vector<32x128xf32>
    %c5_i32_38 = arith.constant 5 : i32
    %123 = vector.broadcast %c5_i32_38 : i32 to vector<32x1xi32>
    %124 = arith.cmpi sge, %16, %123 : vector<32x1xi32>
    %cst_39 = arith.constant 0.000000e+00 : f32
    %125 = vector.shape_cast %124 : vector<32x1xi1> to vector<32x1xi1>
    %126 = vector.broadcast %125 : vector<32x1xi1> to vector<32x128xi1>
    %127 = vector.broadcast %cst_39 : f32 to vector<32x128xf32>
    %128 = arith.select %126, %122, %127 : vector<32x128xi1>, vector<32x128xf32>
    %cst_40 = arith.constant 0.000000e+00 : f32
    %129 = vector.broadcast %cst_40 : f32 to vector<6x128xf32>
    %130 = vector.extract_strided_slice %83 {offsets = [0, 0], sizes = [26, 128], strides = [1, 1]} : vector<32x128xf32> to vector<26x128xf32>
    %131 = tpu.concatenate %129, %130 in 0 : vector<6x128xf32>, vector<26x128xf32> -> vector<32x128xf32>
    %c6_i32_41 = arith.constant 6 : i32
    %132 = vector.broadcast %c6_i32_41 : i32 to vector<32x1xi32>
    %133 = arith.cmpi sge, %16, %132 : vector<32x1xi32>
    %cst_42 = arith.constant 0.000000e+00 : f32
    %134 = vector.shape_cast %133 : vector<32x1xi1> to vector<32x1xi1>
    %135 = vector.broadcast %134 : vector<32x1xi1> to vector<32x128xi1>
    %136 = vector.broadcast %cst_42 : f32 to vector<32x128xf32>
    %137 = arith.select %135, %131, %136 : vector<32x128xi1>, vector<32x128xf32>
    %138 = tpu.concatenate %83, %92, %101, %110, %119, %128, %137 in 1 : vector<32x128xf32>, vector<32x128xf32>, vector<32x128xf32>, vector<32x128xf32>, vector<32x128xf32>, vector<32x128xf32>, vector<32x128xf32> -> vector<32x896xf32>
    %c0_43 = arith.constant 0 : index
    %c0_44 = arith.constant 0 : index
    %139 = vector.load %arg5[%c0_43, %c0_44] : memref<896x128xf32, #tpu.memory_space<vmem>>, vector<896x128xf32>
    %cst_45 = arith.constant dense<0.000000e+00> : vector<32x128xf32>
    %140 = tpu.matmul %138, %139, %cst_45 {dimension_numbers = #tpu.dot_dimension_numbers<[1], [0], [0], [1], [0, 0, 1, 1], [], []>} : vector<32x896xf32>, vector<896x128xf32>, vector<32x128xf32> -> vector<32x128xf32>
    %c0_46 = arith.constant 0 : index
    %c0_47 = arith.constant 0 : index
    %141 = vector.load %arg6[%c0_46, %c0_47] : memref<1x128xf32, #tpu.memory_space<vmem>>, vector<1x128xf32>
    %142 = vector.broadcast %141 : vector<1x128xf32> to vector<32x128xf32>
    %143 = arith.addf %140, %142 : vector<32x128xf32>
    %cst_48 = arith.constant 0.000000e+00 : f32
    %144 = vector.broadcast %cst_48 : f32 to vector<32x128xf32>
    %145 = arith.cmpf ogt, %143, %144 : vector<32x128xf32>
    %cst_49 = arith.constant 0.00999999977 : f32
    %146 = vector.broadcast %cst_49 : f32 to vector<32x128xf32>
    %147 = arith.mulf %146, %143 : vector<32x128xf32>
    %148 = arith.select %145, %143, %147 : vector<32x128xi1>, vector<32x128xf32>
    %cst_50 = arith.constant 0.000000e+00 : f32
    %149 = vector.broadcast %cst_50 : f32 to vector<1x40xf32>
    %150 = vector.extract_strided_slice %18 {offsets = [0, 0], sizes = [31, 40], strides = [1, 1]} : vector<32x40xf32> to vector<31x40xf32>
    %151 = tpu.concatenate %149, %150 in 0 : vector<1x40xf32>, vector<31x40xf32> -> vector<32x40xf32>
    %c1_i32_51 = arith.constant 1 : i32
    %152 = vector.broadcast %c1_i32_51 : i32 to vector<32x1xi32>
    %153 = arith.cmpi sge, %16, %152 : vector<32x1xi32>
    %cst_52 = arith.constant 0.000000e+00 : f32
    %154 = vector.shape_cast %153 : vector<32x1xi1> to vector<32x1xi1>
    %155 = vector.broadcast %154 : vector<32x1xi1> to vector<32x40xi1>
    %156 = vector.broadcast %cst_52 : f32 to vector<32x40xf32>
    %157 = arith.select %155, %151, %156 : vector<32x40xi1>, vector<32x40xf32>
    %158 = tpu.concatenate %18, %157 in 1 : vector<32x40xf32>, vector<32x40xf32> -> vector<32x80xf32>
    %c0_53 = arith.constant 0 : index
    %c0_54 = arith.constant 0 : index
    %159 = vector.load %arg7[%c0_53, %c0_54] : memref<80x128xf32, #tpu.memory_space<vmem>>, vector<80x128xf32>
    %cst_55 = arith.constant dense<0.000000e+00> : vector<32x128xf32>
    %160 = tpu.matmul %158, %159, %cst_55 {dimension_numbers = #tpu.dot_dimension_numbers<[1], [0], [0], [1], [0, 0, 1, 1], [], []>} : vector<32x80xf32>, vector<80x128xf32>, vector<32x128xf32> -> vector<32x128xf32>
    %c0_56 = arith.constant 0 : index
    %c0_57 = arith.constant 0 : index
    %161 = vector.load %arg8[%c0_56, %c0_57] : memref<1x128xf32, #tpu.memory_space<vmem>>, vector<1x128xf32>
    %162 = vector.broadcast %161 : vector<1x128xf32> to vector<32x128xf32>
    %163 = arith.addf %160, %162 : vector<32x128xf32>
    %cst_58 = arith.constant 0.000000e+00 : f32
    %164 = vector.broadcast %cst_58 : f32 to vector<32x128xf32>
    %165 = arith.cmpf ogt, %163, %164 : vector<32x128xf32>
    %cst_59 = arith.constant 0.00999999977 : f32
    %166 = vector.broadcast %cst_59 : f32 to vector<32x128xf32>
    %167 = arith.mulf %166, %163 : vector<32x128xf32>
    %168 = arith.select %165, %163, %167 : vector<32x128xi1>, vector<32x128xf32>
    %cst_60 = arith.constant 0.000000e+00 : f32
    %169 = vector.broadcast %cst_60 : f32 to vector<1x128xf32>
    %170 = vector.extract_strided_slice %168 {offsets = [0, 0], sizes = [31, 128], strides = [1, 1]} : vector<32x128xf32> to vector<31x128xf32>
    %171 = tpu.concatenate %169, %170 in 0 : vector<1x128xf32>, vector<31x128xf32> -> vector<32x128xf32>
    %c1_i32_61 = arith.constant 1 : i32
    %172 = vector.broadcast %c1_i32_61 : i32 to vector<32x1xi32>
    %173 = arith.cmpi sge, %16, %172 : vector<32x1xi32>
    %cst_62 = arith.constant 0.000000e+00 : f32
    %174 = vector.shape_cast %173 : vector<32x1xi1> to vector<32x1xi1>
    %175 = vector.broadcast %174 : vector<32x1xi1> to vector<32x128xi1>
    %176 = vector.broadcast %cst_62 : f32 to vector<32x128xf32>
    %177 = arith.select %175, %171, %176 : vector<32x128xi1>, vector<32x128xf32>
    %178 = tpu.concatenate %168, %177 in 1 : vector<32x128xf32>, vector<32x128xf32> -> vector<32x256xf32>
    %c0_63 = arith.constant 0 : index
    %c0_64 = arith.constant 0 : index
    %179 = vector.load %arg9[%c0_63, %c0_64] : memref<256x128xf32, #tpu.memory_space<vmem>>, vector<256x128xf32>
    %cst_65 = arith.constant dense<0.000000e+00> : vector<32x128xf32>
    %180 = tpu.matmul %178, %179, %cst_65 {dimension_numbers = #tpu.dot_dimension_numbers<[1], [0], [0], [1], [0, 0, 1, 1], [], []>} : vector<32x256xf32>, vector<256x128xf32>, vector<32x128xf32> -> vector<32x128xf32>
    %c0_66 = arith.constant 0 : index
    %c0_67 = arith.constant 0 : index
    %181 = vector.load %arg10[%c0_66, %c0_67] : memref<1x128xf32, #tpu.memory_space<vmem>>, vector<1x128xf32>
    %182 = vector.broadcast %181 : vector<1x128xf32> to vector<32x128xf32>
    %183 = arith.addf %180, %182 : vector<32x128xf32>
    %cst_68 = arith.constant 0.000000e+00 : f32
    %184 = vector.broadcast %cst_68 : f32 to vector<32x128xf32>
    %185 = arith.cmpf ogt, %183, %184 : vector<32x128xf32>
    %cst_69 = arith.constant 0.00999999977 : f32
    %186 = vector.broadcast %cst_69 : f32 to vector<32x128xf32>
    %187 = arith.mulf %186, %183 : vector<32x128xf32>
    %188 = arith.select %185, %183, %187 : vector<32x128xi1>, vector<32x128xf32>
    %189 = vector.extract_strided_slice %148 {offsets = [0, 0], sizes = [16, 128], strides = [1, 1]} : vector<32x128xf32> to vector<16x128xf32>
    %190 = vector.extract_strided_slice %188 {offsets = [0, 0], sizes = [16, 128], strides = [1, 1]} : vector<32x128xf32> to vector<16x128xf32>
    %191 = vector.extract_strided_slice %189 {offsets = [0, 0], sizes = [16, 64], strides = [1, 1]} : vector<16x128xf32> to vector<16x64xf32>
    %192 = vector.extract_strided_slice %189 {offsets = [0, 64], sizes = [16, 64], strides = [1, 1]} : vector<16x128xf32> to vector<16x64xf32>
    %193 = vector.extract_strided_slice %190 {offsets = [0, 0], sizes = [16, 64], strides = [1, 1]} : vector<16x128xf32> to vector<16x64xf32>
    %194 = vector.extract_strided_slice %190 {offsets = [0, 64], sizes = [16, 64], strides = [1, 1]} : vector<16x128xf32> to vector<16x64xf32>
    %cst_70 = arith.constant dense<0xFF800000> : vector<64xf32>
    %195 = vector.multi_reduction <maximumf>, %193, %cst_70 [0] : vector<16x64xf32> to vector<64xf32>
    %196 = vector.shape_cast %195 : vector<64xf32> to vector<1x64xf32>
    %cst_71 = arith.constant dense<0xFF800000> : vector<64xf32>
    %197 = vector.multi_reduction <maximumf>, %191, %cst_71 [0] : vector<16x64xf32> to vector<64xf32>
    %198 = vector.shape_cast %197 : vector<64xf32> to vector<1x64xf32>
    %199 = vector.broadcast %196 : vector<1x64xf32> to vector<16x64xf32>
    %200 = arith.addf %199, %192 : vector<16x64xf32>
    %cst_72 = arith.constant 0.000000e+00 : f32
    %201 = vector.broadcast %cst_72 : f32 to vector<16x64xf32>
    %202 = arith.subf %201, %200 : vector<16x64xf32>
    %203 = math.exp %202 : vector<16x64xf32>
    %cst_73 = arith.constant 1.000000e+00 : f32
    %204 = vector.broadcast %cst_73 : f32 to vector<16x64xf32>
    %205 = arith.addf %204, %203 : vector<16x64xf32>
    %cst_74 = arith.constant 1.000000e+00 : f32
    %206 = vector.broadcast %cst_74 : f32 to vector<16x64xf32>
    %207 = arith.divf %206, %205 : vector<16x64xf32>
    %208 = arith.mulf %191, %207 : vector<16x64xf32>
    %209 = vector.broadcast %198 : vector<1x64xf32> to vector<16x64xf32>
    %210 = arith.addf %209, %194 : vector<16x64xf32>
    %cst_75 = arith.constant 0.000000e+00 : f32
    %211 = vector.broadcast %cst_75 : f32 to vector<16x64xf32>
    %212 = arith.subf %211, %210 : vector<16x64xf32>
    %213 = math.exp %212 : vector<16x64xf32>
    %cst_76 = arith.constant 1.000000e+00 : f32
    %214 = vector.broadcast %cst_76 : f32 to vector<16x64xf32>
    %215 = arith.addf %214, %213 : vector<16x64xf32>
    %cst_77 = arith.constant 1.000000e+00 : f32
    %216 = vector.broadcast %cst_77 : f32 to vector<16x64xf32>
    %217 = arith.divf %216, %215 : vector<16x64xf32>
    %218 = arith.mulf %193, %217 : vector<16x64xf32>
    %cst_78 = arith.constant dense<0xFF800000> : vector<64xf32>
    %219 = vector.multi_reduction <maximumf>, %208, %cst_78 [0] : vector<16x64xf32> to vector<64xf32>
    %220 = vector.shape_cast %219 : vector<64xf32> to vector<1x64xf32>
    %cst_79 = arith.constant dense<0xFF800000> : vector<64xf32>
    %221 = vector.multi_reduction <maximumf>, %218, %cst_79 [0] : vector<16x64xf32> to vector<64xf32>
    %222 = vector.shape_cast %221 : vector<64xf32> to vector<1x64xf32>
    %223 = tpu.concatenate %220, %222 in 1 : vector<1x64xf32>, vector<1x64xf32> -> vector<1x128xf32>
    %224 = vector.extract_strided_slice %148 {offsets = [16, 0], sizes = [16, 128], strides = [1, 1]} : vector<32x128xf32> to vector<16x128xf32>
    %225 = vector.extract_strided_slice %188 {offsets = [16, 0], sizes = [16, 128], strides = [1, 1]} : vector<32x128xf32> to vector<16x128xf32>
    %226 = vector.extract_strided_slice %224 {offsets = [0, 0], sizes = [16, 64], strides = [1, 1]} : vector<16x128xf32> to vector<16x64xf32>
    %227 = vector.extract_strided_slice %224 {offsets = [0, 64], sizes = [16, 64], strides = [1, 1]} : vector<16x128xf32> to vector<16x64xf32>
    %228 = vector.extract_strided_slice %225 {offsets = [0, 0], sizes = [16, 64], strides = [1, 1]} : vector<16x128xf32> to vector<16x64xf32>
    %229 = vector.extract_strided_slice %225 {offsets = [0, 64], sizes = [16, 64], strides = [1, 1]} : vector<16x128xf32> to vector<16x64xf32>
    %cst_80 = arith.constant dense<0xFF800000> : vector<64xf32>
    %230 = vector.multi_reduction <maximumf>, %228, %cst_80 [0] : vector<16x64xf32> to vector<64xf32>
    %231 = vector.shape_cast %230 : vector<64xf32> to vector<1x64xf32>
    %cst_81 = arith.constant dense<0xFF800000> : vector<64xf32>
    %232 = vector.multi_reduction <maximumf>, %226, %cst_81 [0] : vector<16x64xf32> to vector<64xf32>
    %233 = vector.shape_cast %232 : vector<64xf32> to vector<1x64xf32>
    %234 = vector.broadcast %231 : vector<1x64xf32> to vector<16x64xf32>
    %235 = arith.addf %234, %227 : vector<16x64xf32>
    %cst_82 = arith.constant 0.000000e+00 : f32
    %236 = vector.broadcast %cst_82 : f32 to vector<16x64xf32>
    %237 = arith.subf %236, %235 : vector<16x64xf32>
    %238 = math.exp %237 : vector<16x64xf32>
    %cst_83 = arith.constant 1.000000e+00 : f32
    %239 = vector.broadcast %cst_83 : f32 to vector<16x64xf32>
    %240 = arith.addf %239, %238 : vector<16x64xf32>
    %cst_84 = arith.constant 1.000000e+00 : f32
    %241 = vector.broadcast %cst_84 : f32 to vector<16x64xf32>
    %242 = arith.divf %241, %240 : vector<16x64xf32>
    %243 = arith.mulf %226, %242 : vector<16x64xf32>
    %244 = vector.broadcast %233 : vector<1x64xf32> to vector<16x64xf32>
    %245 = arith.addf %244, %229 : vector<16x64xf32>
    %cst_85 = arith.constant 0.000000e+00 : f32
    %246 = vector.broadcast %cst_85 : f32 to vector<16x64xf32>
    %247 = arith.subf %246, %245 : vector<16x64xf32>
    %248 = math.exp %247 : vector<16x64xf32>
    %cst_86 = arith.constant 1.000000e+00 : f32
    %249 = vector.broadcast %cst_86 : f32 to vector<16x64xf32>
    %250 = arith.addf %249, %248 : vector<16x64xf32>
    %cst_87 = arith.constant 1.000000e+00 : f32
    %251 = vector.broadcast %cst_87 : f32 to vector<16x64xf32>
    %252 = arith.divf %251, %250 : vector<16x64xf32>
    %253 = arith.mulf %228, %252 : vector<16x64xf32>
    %cst_88 = arith.constant dense<0xFF800000> : vector<64xf32>
    %254 = vector.multi_reduction <maximumf>, %243, %cst_88 [0] : vector<16x64xf32> to vector<64xf32>
    %255 = vector.shape_cast %254 : vector<64xf32> to vector<1x64xf32>
    %cst_89 = arith.constant dense<0xFF800000> : vector<64xf32>
    %256 = vector.multi_reduction <maximumf>, %253, %cst_89 [0] : vector<16x64xf32> to vector<64xf32>
    %257 = vector.shape_cast %256 : vector<64xf32> to vector<1x64xf32>
    %258 = tpu.concatenate %255, %257 in 1 : vector<1x64xf32>, vector<1x64xf32> -> vector<1x128xf32>
    %259 = tpu.concatenate %223, %258 in 0 : vector<1x128xf32>, vector<1x128xf32> -> vector<2x128xf32>
    %c0_90 = arith.constant 0 : index
    %c0_91 = arith.constant 0 : index
    %260 = vector.load %arg11[%c0_90, %c0_91] : memref<128x3xf32, #tpu.memory_space<vmem>>, vector<128x3xf32>
    %cst_92 = arith.constant dense<0.000000e+00> : vector<2x3xf32>
    %261 = tpu.matmul %259, %260, %cst_92 {dimension_numbers = #tpu.dot_dimension_numbers<[1], [0], [0], [1], [0, 0, 1, 1], [], []>} : vector<2x128xf32>, vector<128x3xf32>, vector<2x3xf32> -> vector<2x3xf32>
    %c0_93 = arith.constant 0 : index
    %c0_94 = arith.constant 0 : index
    %262 = vector.load %arg12[%c0_93, %c0_94] : memref<1x3xf32, #tpu.memory_space<vmem>>, vector<1x3xf32>
    %263 = vector.broadcast %262 : vector<1x3xf32> to vector<2x3xf32>
    %264 = arith.addf %261, %263 : vector<2x3xf32>
    %c0_95 = arith.constant 0 : index
    %c0_96 = arith.constant 0 : index
    %265 = vector.load %arg13[%c0_95, %c0_96] : memref<2x3xf32, #tpu.memory_space<vmem>>, vector<2x3xf32>
    tpu.vector_store %arg13[%c0_95, %c0_96], %264 {strides = array<i32>} : memref<2x3xf32, #tpu.memory_space<vmem>>, vector<2x3xf32>,
    return
  }
  func.func @transform_0(%arg0: i32) -> (i32, i32) {
    %c0_i32 = arith.constant 0 : i32
    %c0_i32_0 = arith.constant 0 : i32
    %c0_i32_1 = arith.constant 0 : i32
    return %c0_i32, %c0_i32_0 : i32, i32
  }
  func.func @transform_1(%arg0: i32) -> (i32, i32) {
    %c0_i32 = arith.constant 0 : i32
    %c0_i32_0 = arith.constant 0 : i32
    %c0_i32_1 = arith.constant 0 : i32
    return %c0_i32, %c0_i32_0 : i32, i32
  }
  func.func @transform_2(%arg0: i32) -> (i32, i32) {
    %c0_i32 = arith.constant 0 : i32
    %c0_i32_0 = arith.constant 0 : i32
    %c0_i32_1 = arith.constant 0 : i32
    return %c0_i32, %c0_i32_0 : i32, i32
  }
  func.func @transform_3(%arg0: i32) -> (i32, i32) {
    %c0_i32 = arith.constant 0 : i32
    %c0_i32_0 = arith.constant 0 : i32
    %c0_i32_1 = arith.constant 0 : i32
    return %c0_i32, %c0_i32_0 : i32, i32
  }
  func.func @transform_4(%arg0: i32) -> (i32, i32) {
    %c0_i32 = arith.constant 0 : i32
    %c0_i32_0 = arith.constant 0 : i32
    %c0_i32_1 = arith.constant 0 : i32
    return %c0_i32, %c0_i32_0 : i32, i32
  }
  func.func @transform_5(%arg0: i32) -> (i32, i32) {
    %c0_i32 = arith.constant 0 : i32
    %c0_i32_0 = arith.constant 0 : i32
    %c0_i32_1 = arith.constant 0 : i32
    return %c0_i32, %c0_i32_0 : i32, i32
  }
  func.func @transform_6(%arg0: i32) -> (i32, i32) {
    %c0_i32 = arith.constant 0 : i32
    %c0_i32_0 = arith.constant 0 : i32
    %c0_i32_1 = arith.constant 0 : i32
    return %c0_i32, %c0_i32_0 : i32, i32
  }
  func.func @transform_7(%arg0: i32) -> (i32, i32) {
    %c0_i32 = arith.constant 0 : i32
    %c0_i32_0 = arith.constant 0 : i32
    %c0_i32_1 = arith.constant 0 : i32
    return %c0_i32, %c0_i32_0 : i32, i32
  }
  func.func @transform_8(%arg0: i32) -> (i32, i32) {
    %c0_i32 = arith.constant 0 : i32
    %c0_i32_0 = arith.constant 0 : i32
    %c0_i32_1 = arith.constant 0 : i32
    return %c0_i32, %c0_i32_0 : i32, i32
  }
  func.func @transform_9(%arg0: i32) -> (i32, i32) {
    %c0_i32 = arith.constant 0 : i32
    %c0_i32_0 = arith.constant 0 : i32
    %c0_i32_1 = arith.constant 0 : i32
    return %c0_i32, %c0_i32_0 : i32, i32
  }
  func.func @transform_10(%arg0: i32) -> (i32, i32) {
    %c0_i32 = arith.constant 0 : i32
    %c0_i32_0 = arith.constant 0 : i32
    %c0_i32_1 = arith.constant 0 : i32
    return %c0_i32, %c0_i32_0 : i32, i32
  }
  func.func @transform_11(%arg0: i32) -> (i32, i32) {
    %c0_i32 = arith.constant 0 : i32
    %c0_i32_0 = arith.constant 0 : i32
    %c0_i32_1 = arith.constant 0 : i32
    return %c0_i32, %c0_i32_0 : i32, i32
  }
  func.func @transform_12(%arg0: i32) -> (i32, i32) {
    %c0_i32 = arith.constant 0 : i32
    %c0_i32_0 = arith.constant 0 : i32
    %c0_i32_1 = arith.constant 0 : i32
    return %c0_i32, %c0_i32_0 : i32, i32
  }
}

</mosaic_0001>

<llo_original>
// kernel: gc_embed3_forward.1
$region0: #{gc_embed3_forward.1}
  #allocation0 [shape = 'u32[]', space=smem, size = 0x4, offset = 0x4, fixed_abs, tag = 'smem constant byte address 0x4 - core index']
  #allocation1 [shape = 'u32[144,128]{1,0:T(1,128)}', space=vmem, size = 0x12000, scoped, tag = 'internal scratch']
  %s0 = inlined_call_operand.vmem [shape: f32[32,48], index: 0, kind: input, shape index: {}]
  %s1 = inlined_call_operand.vmem [shape: f32[32,40], index: 1, kind: input, shape index: {}]
  %s2 = inlined_call_operand.vmem [shape: f32[336,128], index: 2, kind: input, shape index: {}]
  %s3 = inlined_call_operand.vmem [shape: f32[1,128], index: 3, kind: input, shape index: {}]
  %s4 = inlined_call_operand.vmem [shape: f32[896,128], index: 4, kind: input, shape index: {}]
  %s5 = inlined_call_operand.vmem [shape: f32[1,128], index: 5, kind: input, shape index: {}]
  %s6 = inlined_call_operand.vmem [shape: f32[80,128], index: 6, kind: input, shape index: {}]
  %s7 = inlined_call_operand.vmem [shape: f32[1,128], index: 7, kind: input, shape index: {}]
  %s8 = inlined_call_operand.vmem [shape: f32[256,128], index: 8, kind: input, shape index: {}]
  %s9 = inlined_call_operand.vmem [shape: f32[1,128], index: 9, kind: input, shape index: {}]
  %s10 = inlined_call_operand.vmem [shape: f32[128,3], index: 10, kind: input, shape index: {}]
  %s11 = inlined_call_operand.vmem [shape: f32[1,3], index: 11, kind: input, shape index: {}]
  %s12 = inlined_call_operand.hbm [shape: f32[2,3], index: 12, kind: output, shape index: {}]
  %s13 = sld [smem:[#allocation0]]
  $region58: #{gc_embed3_forward.1} parent=0
    _
  %s15 = ssub.s32 1, %s13
  %s16 = scalar_select 0, %s15, %s13
  $region1: #{gc_embed3_forward.1} parent=0
    #allocation2 [shape = 'u8[1024]{0}', space=vmem, size = 0x400, scoped, tag = 'output window, operand 0, single buffered']
    #allocation3 [shape = 's32[1]{0}', space=sflag, size = 0x4, scoped, tag = 'scoped memory for gc_embed3_forward.1']
    %17 = vsyncpa [#allocation3], 0
    // Predicated region
    $region2: #{gc_embed3_forward.1} parent=1 // pred_check
      _
    $region3: #{gc_embed3_forward.1} parent=1 // pred_check_branch
      %19 = sbr.rel (0) target = $region5
    $region4: #{gc_embed3_forward.1} parent=1 // pred_region
      _
    $region5: #{gc_embed3_forward.1} parent=1 // pred_fallthru
      _
    // Predicated region
    $region6: #{gc_embed3_forward.1} parent=1 // pred_check
      _
    $region7: #{gc_embed3_forward.1} parent=1 // pred_check_branch
      %21 = sbr.rel (0) target = $region9
    $region8: #{gc_embed3_forward.1} parent=1 // pred_region
      _
    $region9: #{gc_embed3_forward.1} parent=1 // pred_fallthru
      _
    // Predicated region
    $region10: #{gc_embed3_forward.1} parent=1 // pred_check
      _
    $region11: #{gc_embed3_forward.1} parent=1 // pred_check_branch
      %23 = sbr.rel (0) target = $region13
    $region12: #{gc_embed3_forward.1} parent=1 // pred_region
      _
    $region13: #{gc_embed3_forward.1} parent=1 // pred_fallthru
      _
    // Predicated region
    $region14: #{gc_embed3_forward.1} parent=1 // pred_check
      _
    $region15: #{gc_embed3_forward.1} parent=1 // pred_check_branch
      %25 = sbr.rel (0) target = $region17
    $region16: #{gc_embed3_forward.1} parent=1 // pred_region
      _
    $region17: #{gc_embed3_forward.1} parent=1 // pred_fallthru
      _
    // Predicated region
    $region18: #{gc_embed3_forward.1} parent=1 // pred_check
      _
    $region19: #{gc_embed3_forward.1} parent=1 // pred_check_branch
      %27 = sbr.rel (0) target = $region21
    $region20: #{gc_embed3_forward.1} parent=1 // pred_region
      _
    $region21: #{gc_embed3_forward.1} parent=1 // pred_fallthru
      _
    // Predicated region
    $region22: #{gc_embed3_forward.1} parent=1 // pred_check
      _
    $region23: #{gc_embed3_forward.1} parent=1 // pred_check_branch
      %29 = sbr.rel (0) target = $region25
    $region24: #{gc_embed3_forward.1} parent=1 // pred_region
      _
    $region25: #{gc_embed3_forward.1} parent=1 // pred_fallthru
      _
    // Predicated region
    $region26: #{gc_embed3_forward.1} parent=1 // pred_check
      _
    $region27: #{gc_embed3_forward.1} parent=1 // pred_check_branch
      %31 = sbr.rel (0) target = $region29
    $region28: #{gc_embed3_forward.1} parent=1 // pred_region
      _
    $region29: #{gc_embed3_forward.1} parent=1 // pred_fallthru
      _
    // Predicated region
    $region30: #{gc_embed3_forward.1} parent=1 // pred_check
      _
    $region31: #{gc_embed3_forward.1} parent=1 // pred_check_branch
      %33 = sbr.rel (0) target = $region33
    $region32: #{gc_embed3_forward.1} parent=1 // pred_region
      _
    $region33: #{gc_embed3_forward.1} parent=1 // pred_fallthru
      _
    // Predicated region
    $region34: #{gc_embed3_forward.1} parent=1 // pred_check
      _
    $region35: #{gc_embed3_forward.1} parent=1 // pred_check_branch
      %35 = sbr.rel (0) target = $region37
    $region36: #{gc_embed3_forward.1} parent=1 // pred_region
      _
    $region37: #{gc_embed3_forward.1} parent=1 // pred_fallthru
      _
    // Predicated region
    $region38: #{gc_embed3_forward.1} parent=1 // pred_check
      _
    $region39: #{gc_embed3_forward.1} parent=1 // pred_check_branch
      %37 = sbr.rel (0) target = $region41
    $region40: #{gc_embed3_forward.1} parent=1 // pred_region
      _
    $region41: #{gc_embed3_forward.1} parent=1 // pred_fallthru
      _
    // Predicated region
    $region42: #{gc_embed3_forward.1} parent=1 // pred_check
      _
    $region43: #{gc_embed3_forward.1} parent=1 // pred_check_branch
      %39 = sbr.rel (0) target = $region45
    $region44: #{gc_embed3_forward.1} parent=1 // pred_region
      _
    $region45: #{gc_embed3_forward.1} parent=1 // pred_fallthru
      _
    // Predicated region
    $region46: #{gc_embed3_forward.1} parent=1 // pred_check
      _
    $region47: #{gc_embed3_forward.1} parent=1 // pred_check_branch
      %41 = sbr.rel (0) target = $region49
    $region48: #{gc_embed3_forward.1} parent=1 // pred_region
      _
    $region49: #{gc_embed3_forward.1} parent=1 // pred_fallthru
      _
    %v42 = vlaneseq
    %v43 = vshrl.u32 %v42, 7
    %v44 = vadd.s32 %v43, 8
    %v45 = vadd.s32 %v43, 16
    %v46 = vadd.s32 %v43, 24
    %vm47 = vcmp.lt.s32.totalorder %v43, 0
    %v48 = vsub.s32 0, %v43
    %v49 = vsel %vm47, %v48, %v43
    %v50 = vshrl.u32 %v49, 4
    %v51 = vand.u32 %v49, 15
    %v52 = vsub.s32 0, %v51
    %v53 = vsel %vm47, %v52, %v51
    %vm54 = vcmp.lt.s32.totalorder %v44, 0
    %v55 = vsub.s32 0, %v44
    %v56 = vsel %vm54, %v55, %v44
    %v57 = vshrl.u32 %v56, 4
    %v58 = vand.u32 %v56, 15
    %v59 = vsub.s32 0, %v58
    %v60 = vsel %vm54, %v59, %v58
    %vm61 = vcmp.lt.s32.totalorder %v45, 0
    %v62 = vsub.s32 0, %v45
    %v63 = vsel %vm61, %v62, %v45
    %v64 = vshrl.u32 %v63, 4
    %v65 = vand.u32 %v63, 15
    %v66 = vsub.s32 0, %v65
    %v67 = vsel %vm61, %v66, %v65
    %vm68 = vcmp.lt.s32.totalorder %v46, 0
    %v69 = vsub.s32 0, %v46
    %v70 = vsel %vm68, %v69, %v46
    %v71 = vshrl.u32 %v70, 4
    %v72 = vand.u32 %v70, 15
    %v73 = vsub.s32 0, %v72
    %v74 = vsel %vm68, %v73, %v72
    %vm75 = vcmp.ne.s32.totalorder %v53, 0
    %vm76 = vcmp.ne.s32.totalorder %v60, 0
    %vm77 = vcmp.ne.s32.totalorder %v67, 0
    %vm78 = vcmp.ne.s32.totalorder %v74, 0
    %vm79 = vcmp.lt.s32.totalorder %v53, 0
    %vm80 = vcmp.lt.s32.totalorder %v60, 0
    %vm81 = vcmp.lt.s32.totalorder %v67, 0
    %vm82 = vcmp.lt.s32.totalorder %v74, 0
    %vm83 = vmand %vm79, %vm75
    %vm84 = vmand %vm80, %vm76
    %vm85 = vmand %vm81, %vm77
    %vm86 = vmand %vm82, %vm78
    %v87 = vadd.s32 %v53, 16
    %v88 = vadd.s32 %v60, 16
    %v89 = vadd.s32 %v67, 16
    %v90 = vadd.s32 %v74, 16
    %v91 = vsel %vm83, %v87, %v53
    %v92 = vsel %vm84, %v88, %v60
    %v93 = vsel %vm85, %v89, %v67
    %v94 = vsel %vm86, %v90, %v74
    %v95 = vld [vmem:[%s0] sm:$0xff]
    %v96 = vld [vmem:[%s0 + $0x8] sm:$0xff]
    %v97 = vld [vmem:[%s0 + $0x10] sm:$0xff]
    %v98 = vld [vmem:[%s0 + $0x18] sm:$0xff]
    %v99 = vld [vmem:[%s1] sm:$0xff]
    %v100 = vld [vmem:[%s1 + $0x8] sm:$0xff]
    %v101 = vld [vmem:[%s1 + $0x10] sm:$0xff]
    %v102 = vld [vmem:[%s1 + $0x18] sm:$0xff]
    %vm107 = vcmask 1040384
    %v108 = vrot.slane %v95, 7
    %v109 = vrot.slane %v96, 7
    %v110 = vsel %vm107, %v108, %v109
    %v111 = vrot.slane %v97, 7
    %v112 = vsel %vm107, %v109, %v111
    %v113 = vrot.slane %v98, 7
    %v114 = vsel %vm107, %v111, %v113
    %v119 = vsel %vm107, 0.0, %v108
    %vm120 = vcmp.ge.s32.totalorder %v91, 1
    %vm121 = vcmp.ge.s32.totalorder %v92, 1
    %vm122 = vcmp.ge.s32.totalorder %v93, 1
    %vm123 = vcmp.ge.s32.totalorder %v94, 1
    %v124 = vsel %vm120, 1, 0
    %v125 = vsel %vm121, 1, 0
    %v126 = vsel %vm122, 1, 0
    %v127 = vsel %vm123, 1, 0
    %vm128 = vcmp.eq.s32.totalorder %v124, 1
    %vm129 = vcmp.eq.s32.totalorder %v125, 1
    %vm130 = vcmp.eq.s32.totalorder %v126, 1
    %vm131 = vcmp.eq.s32.totalorder %v127, 1
    %v132 = vsel %vm128, %v119, 0.0
    %v133 = vsel %vm129, %v110, 0.0
    %v134 = vsel %vm130, %v112, 0.0
    %v135 = vsel %vm131, %v114, 0.0
    %vm136 = vcmask 1041408
    %v137 = vrot.slane %v95, 6
    %v138 = vrot.slane %v96, 6
    %v139 = vsel %vm136, %v137, %v138
    %v140 = vrot.slane %v97, 6
    %v141 = vsel %vm136, %v138, %v140
    %v142 = vrot.slane %v98, 6
    %v143 = vsel %vm136, %v140, %v142
    %v148 = vsel %vm136, 0.0, %v137
    %vm149 = vcmp.ge.s32.totalorder %v91, 2
    %vm150 = vcmp.ge.s32.totalorder %v92, 2
    %vm151 = vcmp.ge.s32.totalorder %v93, 2
    %vm152 = vcmp.ge.s32.totalorder %v94, 2
    %v153 = vsel %vm149, 1, 0
    %v154 = vsel %vm150, 1, 0
    %v155 = vsel %vm151, 1, 0
    %v156 = vsel %vm152, 1, 0
    %vm157 = vcmp.eq.s32.totalorder %v153, 1
    %vm158 = vcmp.eq.s32.totalorder %v154, 1
    %vm159 = vcmp.eq.s32.totalorder %v155, 1
    %vm160 = vcmp.eq.s32.totalorder %v156, 1
    %v161 = vsel %vm157, %v148, 0.0
    %v162 = vsel %vm158, %v139, 0.0
    %v163 = vsel %vm159, %v141, 0.0
    %v164 = vsel %vm160, %v143, 0.0
    %vm165 = vcmask 1042432
    %v166 = vrot.slane %v95, 5
    %v167 = vrot.slane %v96, 5
    %v168 = vsel %vm165, %v166, %v167
    %v169 = vrot.slane %v97, 5
    %v170 = vsel %vm165, %v167, %v169
    %v171 = vrot.slane %v98, 5
    %v172 = vsel %vm165, %v169, %v171
    %v177 = vsel %vm165, 0.0, %v166
    %vm178 = vcmp.ge.s32.totalorder %v91, 3
    %vm179 = vcmp.ge.s32.totalorder %v92, 3
    %vm180 = vcmp.ge.s32.totalorder %v93, 3
    %vm181 = vcmp.ge.s32.totalorder %v94, 3
    %v182 = vsel %vm178, 1, 0
    %v183 = vsel %vm179, 1, 0
    %v184 = vsel %vm180, 1, 0
    %v185 = vsel %vm181, 1, 0
    %vm186 = vcmp.eq.s32.totalorder %v182, 1
    %vm187 = vcmp.eq.s32.totalorder %v183, 1
    %vm188 = vcmp.eq.s32.totalorder %v184, 1
    %vm189 = vcmp.eq.s32.totalorder %v185, 1
    %v190 = vsel %vm186, %v177, 0.0
    %v191 = vsel %vm187, %v168, 0.0
    %v192 = vsel %vm188, %v170, 0.0
    %v193 = vsel %vm189, %v172, 0.0
    %vm194 = vcmask 1043456
    %v195 = vrot.slane %v95, 4
    %v196 = vrot.slane %v96, 4
    %v197 = vsel %vm194, %v195, %v196
    %v198 = vrot.slane %v97, 4
    %v199 = vsel %vm194, %v196, %v198
    %v200 = vrot.slane %v98, 4
    %v201 = vsel %vm194, %v198, %v200
    %v206 = vsel %vm194, 0.0, %v195
    %vm207 = vcmp.ge.s32.totalorder %v91, 4
    %vm208 = vcmp.ge.s32.totalorder %v92, 4
    %vm209 = vcmp.ge.s32.totalorder %v93, 4
    %vm210 = vcmp.ge.s32.totalorder %v94, 4
    %v211 = vsel %vm207, 1, 0
    %v212 = vsel %vm208, 1, 0
    %v213 = vsel %vm209, 1, 0
    %v214 = vsel %vm210, 1, 0
    %vm215 = vcmp.eq.s32.totalorder %v211, 1
    %vm216 = vcmp.eq.s32.totalorder %v212, 1
    %vm217 = vcmp.eq.s32.totalorder %v213, 1
    %vm218 = vcmp.eq.s32.totalorder %v214, 1
    %v219 = vsel %vm215, %v206, 0.0
    %v220 = vsel %vm216, %v197, 0.0
    %v221 = vsel %vm217, %v199, 0.0
    %v222 = vsel %vm218, %v201, 0.0
    %vm223 = vcmask 1044480
    %v224 = vrot.slane %v95, 3
    %v225 = vrot.slane %v96, 3
    %v226 = vsel %vm223, %v224, %v225
    %v227 = vrot.slane %v97, 3
    %v228 = vsel %vm223, %v225, %v227
    %v229 = vrot.slane %v98, 3
    %v230 = vsel %vm223, %v227, %v229
    %v235 = vsel %vm223, 0.0, %v224
    %vm236 = vcmp.ge.s32.totalorder %v91, 5
    %vm237 = vcmp.ge.s32.totalorder %v92, 5
    %vm238 = vcmp.ge.s32.totalorder %v93, 5
    %vm239 = vcmp.ge.s32.totalorder %v94, 5
    %v240 = vsel %vm236, 1, 0
    %v241 = vsel %vm237, 1, 0
    %v242 = vsel %vm238, 1, 0
    %v243 = vsel %vm239, 1, 0
    %vm244 = vcmp.eq.s32.totalorder %v240, 1
    %vm245 = vcmp.eq.s32.totalorder %v241, 1
    %vm246 = vcmp.eq.s32.totalorder %v242, 1
    %vm247 = vcmp.eq.s32.totalorder %v243, 1
    %v248 = vsel %vm244, %v235, 0.0
    %v249 = vsel %vm245, %v226, 0.0
    %v250 = vsel %vm246, %v228, 0.0
    %v251 = vsel %vm247, %v230, 0.0
    %vm252 = vcmask 1045504
    %v253 = vrot.slane %v95, 2
    %v254 = vrot.slane %v96, 2
    %v255 = vsel %vm252, %v253, %v254
    %v256 = vrot.slane %v97, 2
    %v257 = vsel %vm252, %v254, %v256
    %v258 = vrot.slane %v98, 2
    %v259 = vsel %vm252, %v256, %v258
    %v264 = vsel %vm252, 0.0, %v253
    %vm265 = vcmp.ge.s32.totalorder %v91, 6
    %vm266 = vcmp.ge.s32.totalorder %v92, 6
    %vm267 = vcmp.ge.s32.totalorder %v93, 6
    %vm268 = vcmp.ge.s32.totalorder %v94, 6
    %v269 = vsel %vm265, 1, 0
    %v270 = vsel %vm266, 1, 0
    %v271 = vsel %vm267, 1, 0
    %v272 = vsel %vm268, 1, 0
    %vm273 = vcmp.eq.s32.totalorder %v269, 1
    %vm274 = vcmp.eq.s32.totalorder %v270, 1
    %vm275 = vcmp.eq.s32.totalorder %v271, 1
    %vm276 = vcmp.eq.s32.totalorder %v272, 1
    %v277 = vsel %vm273, %v264, 0.0
    %v278 = vsel %vm274, %v255, 0.0
    %v279 = vsel %vm275, %v257, 0.0
    %v280 = vsel %vm276, %v259, 0.0
    %285 = vrot.lane.b32.xlu0 %v132, 48
    %v286 = vpop.permute.xlu0 %285
    %287 = vrot.lane.b32.xlu0 %v133, 48
    %v288 = vpop.permute.xlu0 %287
    %289 = vrot.lane.b32.xlu0 %v134, 48
    %v290 = vpop.permute.xlu0 %289
    %291 = vrot.lane.b32.xlu0 %v135, 48
    %v292 = vpop.permute.xlu0 %291
    %301 = vrot.lane.b32.xlu0 %v161, 96
    %v302 = vpop.permute.xlu0 %301
    %303 = vrot.lane.b32.xlu0 %v162, 96
    %v304 = vpop.permute.xlu0 %303
    %305 = vrot.lane.b32.xlu0 %v163, 96
    %v306 = vpop.permute.xlu0 %305
    %307 = vrot.lane.b32.xlu0 %v164, 96
    %v308 = vpop.permute.xlu0 %307
    %317 = vrot.lane.b32.xlu0 %v190, 16
    %v318 = vpop.permute.xlu0 %317
    %319 = vrot.lane.b32.xlu0 %v191, 16
    %v320 = vpop.permute.xlu0 %319
    %321 = vrot.lane.b32.xlu0 %v192, 16
    %v322 = vpop.permute.xlu0 %321
    %323 = vrot.lane.b32.xlu0 %v193, 16
    %v324 = vpop.permute.xlu0 %323
    %333 = vrot.lane.b32.xlu0 %v219, 64
    %v334 = vpop.permute.xlu0 %333
    %335 = vrot.lane.b32.xlu0 %v220, 64
    %v336 = vpop.permute.xlu0 %335
    %337 = vrot.lane.b32.xlu0 %v221, 64
    %v338 = vpop.permute.xlu0 %337
    %339 = vrot.lane.b32.xlu0 %v222, 64
    %v340 = vpop.permute.xlu0 %339
    %349 = vrot.lane.b32.xlu0 %v248, 112
    %v350 = vpop.permute.xlu0 %349
    %351 = vrot.lane.b32.xlu0 %v249, 112
    %v352 = vpop.permute.xlu0 %351
    %353 = vrot.lane.b32.xlu0 %v250, 112
    %v354 = vpop.permute.xlu0 %353
    %355 = vrot.lane.b32.xlu0 %v251, 112
    %v356 = vpop.permute.xlu0 %355
    %365 = vrot.lane.b32.xlu0 %v277, 32
    %v366 = vpop.permute.xlu0 %365
    %367 = vrot.lane.b32.xlu0 %v278, 32
    %v368 = vpop.permute.xlu0 %367
    %369 = vrot.lane.b32.xlu0 %v279, 32
    %v370 = vpop.permute.xlu0 %369
    %371 = vrot.lane.b32.xlu0 %v280, 32
    %v372 = vpop.permute.xlu0 %371
    %vm377 = vcmask 392192
    %v378 = vsel %vm377, %v95, %v286
    %v379 = vsel %vm377, %v96, %v288
    %v380 = vsel %vm377, %v97, %v290
    %v381 = vsel %vm377, %v98, %v292
    %vm382 = vcmask 785408
    %v383 = vsel %vm382, %v378, %v302
    %v384 = vsel %vm382, %v379, %v304
    %v385 = vsel %vm382, %v380, %v306
    %v386 = vsel %vm382, %v381, %v308
    %vm387 = vcmask 130048
    %v388 = vsel %vm387, %v302, %v318
    %v389 = vsel %vm387, %v304, %v320
    %v390 = vsel %vm387, %v306, %v322
    %v391 = vsel %vm387, %v308, %v324
    %vm392 = vcmask 523264
    %v393 = vsel %vm392, %v388, %v334
    %v394 = vsel %vm392, %v389, %v336
    %v395 = vsel %vm392, %v390, %v338
    %v396 = vsel %vm392, %v391, %v340
    %vm397 = vcmask 916480
    %v398 = vsel %vm397, %v393, %v350
    %v399 = vsel %vm397, %v394, %v352
    %v400 = vsel %vm397, %v395, %v354
    %v401 = vsel %vm397, %v396, %v356
    %vm402 = vcmask 261120
    %v403 = vsel %vm402, %v350, %v366
    %v404 = vsel %vm402, %v352, %v368
    %v405 = vsel %vm402, %v354, %v370
    %v406 = vsel %vm402, %v356, %v372
    %v407 = vld [vmem:[%s2] sm:$0xff]
    %v408 = vld [vmem:[%s2 + $0x8] sm:$0xff]
    %v409 = vld [vmem:[%s2 + $0x10] sm:$0xff]
    %v410 = vld [vmem:[%s2 + $0x18] sm:$0xff]
    %v411 = vld [vmem:[%s2 + $0x20] sm:$0xff]
    %v412 = vld [vmem:[%s2 + $0x28] sm:$0xff]
    %v413 = vld [vmem:[%s2 + $0x30] sm:$0xff]
    %v414 = vld [vmem:[%s2 + $0x38] sm:$0xff]
    %v415 = vld [vmem:[%s2 + $0x40] sm:$0xff]
    %v416 = vld [vmem:[%s2 + $0x48] sm:$0xff]
    %v417 = vld [vmem:[%s2 + $0x50] sm:$0xff]
    %v418 = vld [vmem:[%s2 + $0x58] sm:$0xff]
    %v419 = vld [vmem:[%s2 + $0x60] sm:$0xff]
    %v420 = vld [vmem:[%s2 + $0x68] sm:$0xff]
    %v421 = vld [vmem:[%s2 + $0x70] sm:$0xff]
    %v422 = vld [vmem:[%s2 + $0x78] sm:$0xff]
    %v423 = vld [vmem:[%s2 + $0x80] sm:$0xff]
    %v424 = vld [vmem:[%s2 + $0x88] sm:$0xff]
    %v425 = vld [vmem:[%s2 + $0x90] sm:$0xff]
    %v426 = vld [vmem:[%s2 + $0x98] sm:$0xff]
    %v427 = vld [vmem:[%s2 + $0xa0] sm:$0xff]
    %v428 = vld [vmem:[%s2 + $0xa8] sm:$0xff]
    %v429 = vld [vmem:[%s2 + $0xb0] sm:$0xff]
    %v430 = vld [vmem:[%s2 + $0xb8] sm:$0xff]
    %v431 = vld [vmem:[%s2 + $0xc0] sm:$0xff]
    %v432 = vld [vmem:[%s2 + $0xc8] sm:$0xff]
    %v433 = vld [vmem:[%s2 + $0xd0] sm:$0xff]
    %v434 = vld [vmem:[%s2 + $0xd8] sm:$0xff]
    %v435 = vld [vmem:[%s2 + $0xe0] sm:$0xff]
    %v436 = vld [vmem:[%s2 + $0xe8] sm:$0xff]
    %v437 = vld [vmem:[%s2 + $0xf0] sm:$0xff]
    %v438 = vld [vmem:[%s2 + $0xf8] sm:$0xff]
    %v439 = vld [vmem:[%s2 + $0x100] sm:$0xff]
    %v440 = vld [vmem:[%s2 + $0x108] sm:$0xff]
    %v441 = vld [vmem:[%s2 + $0x110] sm:$0xff]
    %v442 = vld [vmem:[%s2 + $0x118] sm:$0xff]
    %v443 = vld [vmem:[%s2 + $0x120] sm:$0xff]
    %v444 = vld [vmem:[%s2 + $0x128] sm:$0xff]
    %v445 = vld [vmem:[%s2 + $0x130] sm:$0xff]
    %v446 = vld [vmem:[%s2 + $0x138] sm:$0xff]
    %v447 = vld [vmem:[%s2 + $0x140] sm:$0xff]
    %v448 = vld [vmem:[%s2 + $0x148] sm:$0xff]
    %v449 = vld [vmem:[%s3] sm:$0x1]
    %v451 = vlaneseq
    %v452 = vshrl.u32 %v451, 7
    %v453 = vsub.s32 0, %v452
    %v454 = vrot.slane %v449, %v453
    %vm456 = vcmask 654336
    %v458 = vsel %vm456, %v403, 0
    %v461 = vsel %vm456, %v404, 0
    %v464 = vsel %vm456, %v405, 0
    %v467 = vsel %vm456, %v406, 0
    %469 = vmatprep.subr.mxu0 0.0
    %470 = vmatpush1.msra.mxu0 %v407
    %471 = vmatprep.subr.mxu0 0.0
    %472 = vmatpush1.msra.mxu0 %v408
    %473 = vmatprep.subr.mxu0 0.0
    %474 = vmatpush1.msra.mxu0 %v409
    %475 = vmatprep.subr.mxu0 0.0
    %476 = vmatpush1.msra.mxu0 %v410
    %477 = vmatprep.subr.mxu0 0.0
    %478 = vmatpush1.msra.mxu0 %v411
    %479 = vmatprep.subr.mxu0 0.0
    %480 = vmatpush1.msra.mxu0 %v412
    %481 = vmatprep.subr.mxu0 0.0
    %482 = vmatpush1.msra.mxu0 %v413
    %483 = vmatprep.subr.mxu0 0.0
    %484 = vmatpush1.msra.mxu0 %v414
    %485 = vmatprep.subr.mxu0 0.0
    %486 = vmatpush1.msra.mxu0 %v415
    %487 = vmatprep.subr.mxu0 0.0
    %488 = vmatpush1.msra.mxu0 %v416
    %489 = vmatprep.subr.mxu0 0.0
    %490 = vmatpush1.msra.mxu0 %v417
    %491 = vmatprep.subr.mxu0 0.0
    %492 = vmatpush1.msra.mxu0 %v418
    %493 = vmatprep.subr.mxu0 0.0
    %494 = vmatpush1.msra.mxu0 %v419
    %495 = vmatprep.subr.mxu0 0.0
    %496 = vmatpush1.msra.mxu0 %v420
    %497 = vmatprep.subr.mxu0 0.0
    %498 = vmatpush1.msra.mxu0 %v421
    %499 = vmatprep.subr.mxu0 0.0
    %500 = vmatpush1.msra.mxu0 %v422
    %501 = vmatprep.subr.mxu0 0.0
    %502 = vmatpush1.msra.mxu0 %v423
    %503 = vmatprep.subr.mxu0 0.0
    %504 = vmatpush1.msra.mxu0 %v424
    %505 = vmatprep.subr.mxu0 0.0
    %506 = vmatpush1.msra.mxu0 %v425
    %507 = vmatprep.subr.mxu0 0.0
    %508 = vmatpush1.msra.mxu0 %v426
    %509 = vmatprep.subr.mxu0 0.0
    %510 = vmatpush1.msra.mxu0 %v427
    %511 = vmatprep.subr.mxu0 0.0
    %512 = vmatpush1.msra.mxu0 %v428
    %513 = vmatprep.subr.mxu0 0.0
    %514 = vmatpush1.msra.mxu0 %v429
    %515 = vmatprep.subr.mxu0 0.0
    %516 = vmatpush1.msra.mxu0 %v430
    %517 = vmatprep.subr.mxu0 0.0
    %518 = vmatpush1.msra.mxu0 %v431
    %519 = vmatprep.subr.mxu0 0.0
    %520 = vmatpush1.msra.mxu0 %v432
    %521 = vmatprep.subr.mxu0 0.0
    %522 = vmatpush1.msra.mxu0 %v433
    %523 = vmatprep.subr.mxu0 0.0
    %524 = vmatpush1.msra.mxu0 %v434
    %525 = vmatprep.subr.mxu0 0.0
    %526 = vmatpush1.msra.mxu0 %v435
    %527 = vmatprep.subr.mxu0 0.0
    %528 = vmatpush1.msra.mxu0 %v436
    %529 = vmatprep.subr.mxu0 0.0
    %530 = vmatpush1.msra.mxu0 %v437
    %531 = vmatprep.subr.mxu0 0.0
    %532 = vmatpush1.msra.mxu0 %v438
    %533 = vmatprep.mubr.f32.mxu0 %v398
    %534 = vmatmul.mubr.f32.gmra.mrb[0].mxu0 %v383
    %v535 = vpop.f32.mrb[0].mxu0
    %v536 = vadd.f32 %v454, %v535
    %v537 = vpop.f32.mrb[0].mxu0
    %538 = vmatprep.mubr.f32.mxu0 %v399
    %539 = vmatmul.mubr.f32.gmra.mrb[0].mxu0 %v384
    %v540 = vpop.f32.mrb[0].mxu0
    %v541 = vadd.f32 %v454, %v540
    %v542 = vpop.f32.mrb[0].mxu0
    %543 = vmatprep.mubr.f32.mxu0 %v400
    %544 = vmatmul.mubr.f32.gmra.mrb[0].mxu0 %v385
    %v545 = vpop.f32.mrb[0].mxu0
    %v546 = vadd.f32 %v454, %v545
    %v547 = vpop.f32.mrb[0].mxu0
    %548 = vmatprep.mubr.f32.mxu0 %v401
    %549 = vmatmul.mubr.f32.gmra.mrb[0].mxu0 %v386
    %v550 = vpop.f32.mrb[0].mxu0
    %v551 = vadd.f32 %v454, %v550
    %v552 = vpop.f32.mrb[0].mxu0
    %553 = vdwg.mxu0
    %554 = vmatprep.subr.mxu0 0.0
    %555 = vmatpush1.msra.mxu0 %v439
    %556 = vmatprep.subr.mxu0 0.0
    %557 = vmatpush1.msra.mxu0 %v440
    %558 = vmatprep.subr.mxu0 0.0
    %559 = vmatpush1.msra.mxu0 %v441
    %560 = vmatprep.subr.mxu0 0.0
    %561 = vmatpush1.msra.mxu0 %v442
    %562 = vmatprep.subr.mxu0 0.0
    %563 = vmatpush1.msra.mxu0 %v443
    %564 = vmatprep.subr.mxu0 0.0
    %565 = vmatpush1.msra.mxu0 %v444
    %566 = vmatprep.subr.mxu0 0.0
    %567 = vmatpush1.msra.mxu0 %v445
    %568 = vmatprep.subr.mxu0 0.0
    %569 = vmatpush1.msra.mxu0 %v446
    %570 = vmatprep.subr.mxu0 0.0
    %571 = vmatpush1.msra.mxu0 %v447
    %572 = vmatprep.subr.mxu0 0.0
    %573 = vmatpush1.msra.mxu0 %v448
    %574 = vmatprep.subr.mxu0 0.0
    %575 = vmatpush1.msra.mxu0 0.0
    %576 = vmatprep.subr.mxu0 0.0
    %577 = vmatpush1.msra.mxu0 0.0
    %578 = vmatprep.subr.mxu0 0.0
    %579 = vmatpush1.msra.mxu0 0.0
    %580 = vmatprep.subr.mxu0 0.0
    %581 = vmatpush1.msra.mxu0 0.0
    %582 = vmatprep.subr.mxu0 0.0
    %583 = vmatpush1.msra.mxu0 0.0
    %584 = vmatprep.subr.mxu0 0.0
    %585 = vmatpush1.msra.mxu0 0.0
    %586 = vmatprep.subr.mxu0 0.0
    %587 = vmatpush1.msra.mxu0 0.0
    %588 = vmatprep.subr.mxu0 0.0
    %589 = vmatpush1.msra.mxu0 0.0
    %590 = vmatprep.subr.mxu0 0.0
    %591 = vmatpush1.msra.mxu0 0.0
    %592 = vmatprep.subr.mxu0 0.0
    %593 = vmatpush1.msra.mxu0 0.0
    %594 = vmatprep.subr.mxu0 0.0
    %595 = vmatpush1.msra.mxu0 0.0
    %596 = vmatprep.subr.mxu0 0.0
    %597 = vmatpush1.msra.mxu0 0.0
    %598 = vmatprep.subr.mxu0 0.0
    %599 = vmatpush1.msra.mxu0 0.0
    %600 = vmatprep.subr.mxu0 0.0
    %601 = vmatpush1.msra.mxu0 0.0
    %602 = vmatprep.subr.mxu0 0.0
    %603 = vmatpush1.msra.mxu0 0.0
    %604 = vmatprep.subr.mxu0 0.0
    %605 = vmatpush1.msra.mxu0 0.0
    %606 = vmatprep.subr.mxu0 0.0
    %607 = vmatpush1.msra.mxu0 0.0
    %608 = vmatprep.subr.mxu0 0.0
    %609 = vmatpush1.msra.mxu0 0.0
    %610 = vmatprep.subr.mxu0 0.0
    %611 = vmatpush1.msra.mxu0 0.0
    %612 = vmatprep.subr.mxu0 0.0
    %613 = vmatpush1.msra.mxu0 0.0
    %614 = vmatprep.subr.mxu0 0.0
    %615 = vmatpush1.msra.mxu0 0.0
    %616 = vmatprep.subr.mxu0 0.0
    %617 = vmatpush1.msra.mxu0 0.0
    %618 = vmatprep.mubr.f32.mxu0 0.0
    %619 = vmatmul.mubr.f32.gmra.mrb[0].mxu0 %v458
    %v620 = vpop.f32.mrb[0].mxu0
    %v621 = vadd.f32 %v536, %v620
    %v622 = vpop.f32.mrb[0].mxu0
    %623 = vmatprep.mubr.f32.mxu0 0.0
    %624 = vmatmul.mubr.f32.gmra.mrb[0].mxu0 %v461
    %v625 = vpop.f32.mrb[0].mxu0
    %v626 = vadd.f32 %v541, %v625
    %v627 = vpop.f32.mrb[0].mxu0
    %628 = vmatprep.mubr.f32.mxu0 0.0
    %629 = vmatmul.mubr.f32.gmra.mrb[0].mxu0 %v464
    %v630 = vpop.f32.mrb[0].mxu0
    %v631 = vadd.f32 %v546, %v630
    %v632 = vpop.f32.mrb[0].mxu0
    %633 = vmatprep.mubr.f32.mxu0 0.0
    %634 = vmatmul.mubr.f32.gmra.mrb[0].mxu0 %v467
    %v635 = vpop.f32.mrb[0].mxu0
    %v636 = vadd.f32 %v551, %v635
    %v637 = vpop.f32.mrb[0].mxu0
    %638 = vdwg.mxu0
    %vm639 = vcmp.gt.f32.partialorder %v621, 0.0
    %vm640 = vcmp.gt.f32.partialorder %v626, 0.0
    %vm641 = vcmp.gt.f32.partialorder %v631, 0.0
    %vm642 = vcmp.gt.f32.partialorder %v636, 0.0
    %v643 = vmul.f32 %v621, 0.01
    %v644 = vmul.f32 %v626, 0.01
    %v645 = vmul.f32 %v631, 0.01
    %v646 = vmul.f32 %v636, 0.01
    %v647 = vsel %vm639, %v621, %v643
    %v648 = vsel %vm640, %v626, %v644
    %v649 = vsel %vm641, %v631, %v645
    %v650 = vsel %vm642, %v636, %v646
    %v655 = vrot.slane %v647, 7
    %v656 = vrot.slane %v648, 7
    %v657 = vsel %vm107, %v655, %v656
    %v658 = vrot.slane %v649, 7
    %v659 = vsel %vm107, %v656, %v658
    %v660 = vrot.slane %v650, 7
    %v661 = vsel %vm107, %v658, %v660
    %v666 = vsel %vm107, 0.0, %v655
    %v667 = vsel %vm128, %v666, 0.0
    %v668 = vsel %vm129, %v657, 0.0
    %v669 = vsel %vm130, %v659, 0.0
    %v670 = vsel %vm131, %v661, 0.0
    %v671 = vrot.slane %v647, 6
    %v672 = vrot.slane %v648, 6
    %v673 = vsel %vm136, %v671, %v672
    %v674 = vrot.slane %v649, 6
    %v675 = vsel %vm136, %v672, %v674
    %v676 = vrot.slane %v650, 6
    %v677 = vsel %vm136, %v674, %v676
    %v682 = vsel %vm136, 0.0, %v671
    %v683 = vsel %vm157, %v682, 0.0
    %v684 = vsel %vm158, %v673, 0.0
    %v685 = vsel %vm159, %v675, 0.0
    %v686 = vsel %vm160, %v677, 0.0
    %v687 = vrot.slane %v647, 5
    %v688 = vrot.slane %v648, 5
    %v689 = vsel %vm165, %v687, %v688
    %v690 = vrot.slane %v649, 5
    %v691 = vsel %vm165, %v688, %v690
    %v692 = vrot.slane %v650, 5
    %v693 = vsel %vm165, %v690, %v692
    %v698 = vsel %vm165, 0.0, %v687
    %v699 = vsel %vm186, %v698, 0.0
    %v700 = vsel %vm187, %v689, 0.0
    %v701 = vsel %vm188, %v691, 0.0
    %v702 = vsel %vm189, %v693, 0.0
    %v703 = vrot.slane %v647, 4
    %v704 = vrot.slane %v648, 4
    %v705 = vsel %vm194, %v703, %v704
    %v706 = vrot.slane %v649, 4
    %v707 = vsel %vm194, %v704, %v706
    %v708 = vrot.slane %v650, 4
    %v709 = vsel %vm194, %v706, %v708
    %v714 = vsel %vm194, 0.0, %v703
    %v715 = vsel %vm215, %v714, 0.0
    %v716 = vsel %vm216, %v705, 0.0
    %v717 = vsel %vm217, %v707, 0.0
    %v718 = vsel %vm218, %v709, 0.0
    %v719 = vrot.slane %v647, 3
    %v720 = vrot.slane %v648, 3
    %v721 = vsel %vm223, %v719, %v720
    %v722 = vrot.slane %v649, 3
    %v723 = vsel %vm223, %v720, %v722
    %v724 = vrot.slane %v650, 3
    %v725 = vsel %vm223, %v722, %v724
    %v730 = vsel %vm223, 0.0, %v719
    %v731 = vsel %vm244, %v730, 0.0
    %v732 = vsel %vm245, %v721, 0.0
    %v733 = vsel %vm246, %v723, 0.0
    %v734 = vsel %vm247, %v725, 0.0
    %v735 = vrot.slane %v647, 2
    %v736 = vrot.slane %v648, 2
    %v737 = vsel %vm252, %v735, %v736
    %v738 = vrot.slane %v649, 2
    %v739 = vsel %vm252, %v736, %v738
    %v740 = vrot.slane %v650, 2
    %v741 = vsel %vm252, %v738, %v740
    %v746 = vsel %vm252, 0.0, %v735
    %v747 = vsel %vm273, %v746, 0.0
    %v748 = vsel %vm274, %v737, 0.0
    %v749 = vsel %vm275, %v739, 0.0
    %v750 = vsel %vm276, %v741, 0.0
    %v751 = vld [vmem:[%s4] sm:$0xff]
    %v752 = vld [vmem:[%s4 + $0x8] sm:$0xff]
    %v753 = vld [vmem:[%s4 + $0x10] sm:$0xff]
    %v754 = vld [vmem:[%s4 + $0x18] sm:$0xff]
    %v755 = vld [vmem:[%s4 + $0x20] sm:$0xff]
    %v756 = vld [vmem:[%s4 + $0x28] sm:$0xff]
    %v757 = vld [vmem:[%s4 + $0x30] sm:$0xff]
    %v758 = vld [vmem:[%s4 + $0x38] sm:$0xff]
    %v759 = vld [vmem:[%s4 + $0x40] sm:$0xff]
    %v760 = vld [vmem:[%s4 + $0x48] sm:$0xff]
    %v761 = vld [vmem:[%s4 + $0x50] sm:$0xff]
    %v762 = vld [vmem:[%s4 + $0x58] sm:$0xff]
    %v763 = vld [vmem:[%s4 + $0x60] sm:$0xff]
    %v764 = vld [vmem:[%s4 + $0x68] sm:$0xff]
    %v765 = vld [vmem:[%s4 + $0x70] sm:$0xff]
    %v766 = vld [vmem:[%s4 + $0x78] sm:$0xff]
    %v767 = vld [vmem:[%s4 + $0x80] sm:$0xff]
    %v768 = vld [vmem:[%s4 + $0x88] sm:$0xff]
    %v769 = vld [vmem:[%s4 + $0x90] sm:$0xff]
    %v770 = vld [vmem:[%s4 + $0x98] sm:$0xff]
    %v771 = vld [vmem:[%s4 + $0xa0] sm:$0xff]
    %v772 = vld [vmem:[%s4 + $0xa8] sm:$0xff]
    %v773 = vld [vmem:[%s4 + $0xb0] sm:$0xff]
    %v774 = vld [vmem:[%s4 + $0xb8] sm:$0xff]
    %v775 = vld [vmem:[%s4 + $0xc0] sm:$0xff]
    %v776 = vld [vmem:[%s4 + $0xc8] sm:$0xff]
    %v777 = vld [vmem:[%s4 + $0xd0] sm:$0xff]
    %v778 = vld [vmem:[%s4 + $0xd8] sm:$0xff]
    %v779 = vld [vmem:[%s4 + $0xe0] sm:$0xff]
    %v780 = vld [vmem:[%s4 + $0xe8] sm:$0xff]
    %v781 = vld [vmem:[%s4 + $0xf0] sm:$0xff]
    %v782 = vld [vmem:[%s4 + $0xf8] sm:$0xff]
    %v783 = vld [vmem:[%s4 + $0x100] sm:$0xff]
    %v784 = vld [vmem:[%s4 + $0x108] sm:$0xff]
    %v785 = vld [vmem:[%s4 + $0x110] sm:$0xff]
    %v786 = vld [vmem:[%s4 + $0x118] sm:$0xff]
    %v787 = vld [vmem:[%s4 + $0x120] sm:$0xff]
    %v788 = vld [vmem:[%s4 + $0x128] sm:$0xff]
    %v789 = vld [vmem:[%s4 + $0x130] sm:$0xff]
    %v790 = vld [vmem:[%s4 + $0x138] sm:$0xff]
    %v791 = vld [vmem:[%s4 + $0x140] sm:$0xff]
    %v792 = vld [vmem:[%s4 + $0x148] sm:$0xff]
    %v793 = vld [vmem:[%s4 + $0x150] sm:$0xff]
    %v794 = vld [vmem:[%s4 + $0x158] sm:$0xff]
    %v795 = vld [vmem:[%s4 + $0x160] sm:$0xff]
    %v796 = vld [vmem:[%s4 + $0x168] sm:$0xff]
    %v797 = vld [vmem:[%s4 + $0x170] sm:$0xff]
    %v798 = vld [vmem:[%s4 + $0x178] sm:$0xff]
    %v799 = vld [vmem:[%s4 + $0x180] sm:$0xff]
    %v800 = vld [vmem:[%s4 + $0x188] sm:$0xff]
    %v801 = vld [vmem:[%s4 + $0x190] sm:$0xff]
    %v802 = vld [vmem:[%s4 + $0x198] sm:$0xff]
    %v803 = vld [vmem:[%s4 + $0x1a0] sm:$0xff]
    %v804 = vld [vmem:[%s4 + $0x1a8] sm:$0xff]
    %v805 = vld [vmem:[%s4 + $0x1b0] sm:$0xff]
    %v806 = vld [vmem:[%s4 + $0x1b8] sm:$0xff]
    %v807 = vld [vmem:[%s4 + $0x1c0] sm:$0xff]
    %v808 = vld [vmem:[%s4 + $0x1c8] sm:$0xff]
    %v809 = vld [vmem:[%s4 + $0x1d0] sm:$0xff]
    %v810 = vld [vmem:[%s4 + $0x1d8] sm:$0xff]
    %v811 = vld [vmem:[%s4 + $0x1e0] sm:$0xff]
    %v812 = vld [vmem:[%s4 + $0x1e8] sm:$0xff]
    %v813 = vld [vmem:[%s4 + $0x1f0] sm:$0xff]
    %v814 = vld [vmem:[%s4 + $0x1f8] sm:$0xff]
    %v815 = vld [vmem:[%s4 + $0x200] sm:$0xff]
    %v816 = vld [vmem:[%s4 + $0x208] sm:$0xff]
    %v817 = vld [vmem:[%s4 + $0x210] sm:$0xff]
    %v818 = vld [vmem:[%s4 + $0x218] sm:$0xff]
    %v819 = vld [vmem:[%s4 + $0x220] sm:$0xff]
    %v820 = vld [vmem:[%s4 + $0x228] sm:$0xff]
    %v821 = vld [vmem:[%s4 + $0x230] sm:$0xff]
    %v822 = vld [vmem:[%s4 + $0x238] sm:$0xff]
    %v823 = vld [vmem:[%s4 + $0x240] sm:$0xff]
    %v824 = vld [vmem:[%s4 + $0x248] sm:$0xff]
    %v825 = vld [vmem:[%s4 + $0x250] sm:$0xff]
    %v826 = vld [vmem:[%s4 + $0x258] sm:$0xff]
    %v827 = vld [vmem:[%s4 + $0x260] sm:$0xff]
    %v828 = vld [vmem:[%s4 + $0x268] sm:$0xff]
    %v829 = vld [vmem:[%s4 + $0x270] sm:$0xff]
    %v830 = vld [vmem:[%s4 + $0x278] sm:$0xff]
    %v831 = vld [vmem:[%s4 + $0x280] sm:$0xff]
    %v832 = vld [vmem:[%s4 + $0x288] sm:$0xff]
    %v833 = vld [vmem:[%s4 + $0x290] sm:$0xff]
    %v834 = vld [vmem:[%s4 + $0x298] sm:$0xff]
    %v835 = vld [vmem:[%s4 + $0x2a0] sm:$0xff]
    %v836 = vld [vmem:[%s4 + $0x2a8] sm:$0xff]
    %v837 = vld [vmem:[%s4 + $0x2b0] sm:$0xff]
    %v838 = vld [vmem:[%s4 + $0x2b8] sm:$0xff]
    %v839 = vld [vmem:[%s4 + $0x2c0] sm:$0xff]
    %v840 = vld [vmem:[%s4 + $0x2c8] sm:$0xff]
    %v841 = vld [vmem:[%s4 + $0x2d0] sm:$0xff]
    %v842 = vld [vmem:[%s4 + $0x2d8] sm:$0xff]
    %v843 = vld [vmem:[%s4 + $0x2e0] sm:$0xff]
    %v844 = vld [vmem:[%s4 + $0x2e8] sm:$0xff]
    %v845 = vld [vmem:[%s4 + $0x2f0] sm:$0xff]
    %v846 = vld [vmem:[%s4 + $0x2f8] sm:$0xff]
    %v847 = vld [vmem:[%s4 + $0x300] sm:$0xff]
    %v848 = vld [vmem:[%s4 + $0x308] sm:$0xff]
    %v849 = vld [vmem:[%s4 + $0x310] sm:$0xff]
    %v850 = vld [vmem:[%s4 + $0x318] sm:$0xff]
    %v851 = vld [vmem:[%s4 + $0x320] sm:$0xff]
    %v852 = vld [vmem:[%s4 + $0x328] sm:$0xff]
    %v853 = vld [vmem:[%s4 + $0x330] sm:$0xff]
    %v854 = vld [vmem:[%s4 + $0x338] sm:$0xff]
    %v855 = vld [vmem:[%s4 + $0x340] sm:$0xff]
    %v856 = vld [vmem:[%s4 + $0x348] sm:$0xff]
    %v857 = vld [vmem:[%s4 + $0x350] sm:$0xff]
    %v858 = vld [vmem:[%s4 + $0x358] sm:$0xff]
    %v859 = vld [vmem:[%s4 + $0x360] sm:$0xff]
    %v860 = vld [vmem:[%s4 + $0x368] sm:$0xff]
    %v861 = vld [vmem:[%s4 + $0x370] sm:$0xff]
    %v862 = vld [vmem:[%s4 + $0x378] sm:$0xff]
    %v863 = vld [vmem:[%s5] sm:$0x1]
    %v865 = vlaneseq
    %v866 = vshrl.u32 %v865, 7
    %v867 = vsub.s32 0, %v866
    %v868 = vrot.slane %v863, %v867
    %870 = vmatprep.subr.mxu0 0.0
    %871 = vmatpush1.msra.mxu0 %v751
    %872 = vmatprep.subr.mxu0 0.0
    %873 = vmatpush1.msra.mxu0 %v752
    %874 = vmatprep.subr.mxu0 0.0
    %875 = vmatpush1.msra.mxu0 %v753
    %876 = vmatprep.subr.mxu0 0.0
    %877 = vmatpush1.msra.mxu0 %v754
    %878 = vmatprep.subr.mxu0 0.0
    %879 = vmatpush1.msra.mxu0 %v755
    %880 = vmatprep.subr.mxu0 0.0
    %881 = vmatpush1.msra.mxu0 %v756
    %882 = vmatprep.subr.mxu0 0.0
    %883 = vmatpush1.msra.mxu0 %v757
    %884 = vmatprep.subr.mxu0 0.0
    %885 = vmatpush1.msra.mxu0 %v758
    %886 = vmatprep.subr.mxu0 0.0
    %887 = vmatpush1.msra.mxu0 %v759
    %888 = vmatprep.subr.mxu0 0.0
    %889 = vmatpush1.msra.mxu0 %v760
    %890 = vmatprep.subr.mxu0 0.0
    %891 = vmatpush1.msra.mxu0 %v761
    %892 = vmatprep.subr.mxu0 0.0
    %893 = vmatpush1.msra.mxu0 %v762
    %894 = vmatprep.subr.mxu0 0.0
    %895 = vmatpush1.msra.mxu0 %v763
    %896 = vmatprep.subr.mxu0 0.0
    %897 = vmatpush1.msra.mxu0 %v764
    %898 = vmatprep.subr.mxu0 0.0
    %899 = vmatpush1.msra.mxu0 %v765
    %900 = vmatprep.subr.mxu0 0.0
    %901 = vmatpush1.msra.mxu0 %v766
    %902 = vmatprep.subr.mxu0 0.0
    %903 = vmatpush1.msra.mxu0 %v767
    %904 = vmatprep.subr.mxu0 0.0
    %905 = vmatpush1.msra.mxu0 %v768
    %906 = vmatprep.subr.mxu0 0.0
    %907 = vmatpush1.msra.mxu0 %v769
    %908 = vmatprep.subr.mxu0 0.0
    %909 = vmatpush1.msra.mxu0 %v770
    %910 = vmatprep.subr.mxu0 0.0
    %911 = vmatpush1.msra.mxu0 %v771
    %912 = vmatprep.subr.mxu0 0.0
    %913 = vmatpush1.msra.mxu0 %v772
    %914 = vmatprep.subr.mxu0 0.0
    %915 = vmatpush1.msra.mxu0 %v773
    %916 = vmatprep.subr.mxu0 0.0
    %917 = vmatpush1.msra.mxu0 %v774
    %918 = vmatprep.subr.mxu0 0.0
    %919 = vmatpush1.msra.mxu0 %v775
    %920 = vmatprep.subr.mxu0 0.0
    %921 = vmatpush1.msra.mxu0 %v776
    %922 = vmatprep.subr.mxu0 0.0
    %923 = vmatpush1.msra.mxu0 %v777
    %924 = vmatprep.subr.mxu0 0.0
    %925 = vmatpush1.msra.mxu0 %v778
    %926 = vmatprep.subr.mxu0 0.0
    %927 = vmatpush1.msra.mxu0 %v779
    %928 = vmatprep.subr.mxu0 0.0
    %929 = vmatpush1.msra.mxu0 %v780
    %930 = vmatprep.subr.mxu0 0.0
    %931 = vmatpush1.msra.mxu0 %v781
    %932 = vmatprep.subr.mxu0 0.0
    %933 = vmatpush1.msra.mxu0 %v782
    %934 = vmatprep.mubr.f32.mxu0 %v667
    %935 = vmatmul.mubr.f32.gmra.mrb[0].mxu0 %v647
    %v936 = vpop.f32.mrb[0].mxu0
    %v937 = vadd.f32 %v868, %v936
    %v938 = vpop.f32.mrb[0].mxu0
    %939 = vmatprep.mubr.f32.mxu0 %v668
    %940 = vmatmul.mubr.f32.gmra.mrb[0].mxu0 %v648
    %v941 = vpop.f32.mrb[0].mxu0
    %v942 = vadd.f32 %v868, %v941
    %v943 = vpop.f32.mrb[0].mxu0
    %944 = vmatprep.mubr.f32.mxu0 %v669
    %945 = vmatmul.mubr.f32.gmra.mrb[0].mxu0 %v649
    %v946 = vpop.f32.mrb[0].mxu0
    %v947 = vadd.f32 %v868, %v946
    %v948 = vpop.f32.mrb[0].mxu0
    %949 = vmatprep.mubr.f32.mxu0 %v670
    %950 = vmatmul.mubr.f32.gmra.mrb[0].mxu0 %v650
    %v951 = vpop.f32.mrb[0].mxu0
    %v952 = vadd.f32 %v868, %v951
    %v953 = vpop.f32.mrb[0].mxu0
    %954 = vdwg.mxu0
    %955 = vmatprep.subr.mxu0 0.0
    %956 = vmatpush1.msra.mxu0 %v783
    %957 = vmatprep.subr.mxu0 0.0
    %958 = vmatpush1.msra.mxu0 %v784
    %959 = vmatprep.subr.mxu0 0.0
    %960 = vmatpush1.msra.mxu0 %v785
    %961 = vmatprep.subr.mxu0 0.0
    %962 = vmatpush1.msra.mxu0 %v786
    %963 = vmatprep.subr.mxu0 0.0
    %964 = vmatpush1.msra.mxu0 %v787
    %965 = vmatprep.subr.mxu0 0.0
    %966 = vmatpush1.msra.mxu0 %v788
    %967 = vmatprep.subr.mxu0 0.0
    %968 = vmatpush1.msra.mxu0 %v789
    %969 = vmatprep.subr.mxu0 0.0
    %970 = vmatpush1.msra.mxu0 %v790
    %971 = vmatprep.subr.mxu0 0.0
    %972 = vmatpush1.msra.mxu0 %v791
    %973 = vmatprep.subr.mxu0 0.0
    %974 = vmatpush1.msra.mxu0 %v792
    %975 = vmatprep.subr.mxu0 0.0
    %976 = vmatpush1.msra.mxu0 %v793
    %977 = vmatprep.subr.mxu0 0.0
    %978 = vmatpush1.msra.mxu0 %v794
    %979 = vmatprep.subr.mxu0 0.0
    %980 = vmatpush1.msra.mxu0 %v795
    %981 = vmatprep.subr.mxu0 0.0
    %982 = vmatpush1.msra.mxu0 %v796
    %983 = vmatprep.subr.mxu0 0.0
    %984 = vmatpush1.msra.mxu0 %v797
    %985 = vmatprep.subr.mxu0 0.0
    %986 = vmatpush1.msra.mxu0 %v798
    %987 = vmatprep.subr.mxu0 0.0
    %988 = vmatpush1.msra.mxu0 %v799
    %989 = vmatprep.subr.mxu0 0.0
    %990 = vmatpush1.msra.mxu0 %v800
    %991 = vmatprep.subr.mxu0 0.0
    %992 = vmatpush1.msra.mxu0 %v801
    %993 = vmatprep.subr.mxu0 0.0
    %994 = vmatpush1.msra.mxu0 %v802
    %995 = vmatprep.subr.mxu0 0.0
    %996 = vmatpush1.msra.mxu0 %v803
    %997 = vmatprep.subr.mxu0 0.0
    %998 = vmatpush1.msra.mxu0 %v804
    %999 = vmatprep.subr.mxu0 0.0
    %1000 = vmatpush1.msra.mxu0 %v805
    %1001 = vmatprep.subr.mxu0 0.0
    %1002 = vmatpush1.msra.mxu0 %v806
    %1003 = vmatprep.subr.mxu0 0.0
    %1004 = vmatpush1.msra.mxu0 %v807
    %1005 = vmatprep.subr.mxu0 0.0
    %1006 = vmatpush1.msra.mxu0 %v808
    %1007 = vmatprep.subr.mxu0 0.0
    %1008 = vmatpush1.msra.mxu0 %v809
    %1009 = vmatprep.subr.mxu0 0.0
    %1010 = vmatpush1.msra.mxu0 %v810
    %1011 = vmatprep.subr.mxu0 0.0
    %1012 = vmatpush1.msra.mxu0 %v811
    %1013 = vmatprep.subr.mxu0 0.0
    %1014 = vmatpush1.msra.mxu0 %v812
    %1015 = vmatprep.subr.mxu0 0.0
    %1016 = vmatpush1.msra.mxu0 %v813
    %1017 = vmatprep.subr.mxu0 0.0
    %1018 = vmatpush1.msra.mxu0 %v814
    %1019 = vmatprep.mubr.f32.mxu0 %v699
    %1020 = vmatmul.mubr.f32.gmra.mrb[0].mxu0 %v683
    %v1021 = vpop.f32.mrb[0].mxu0
    %v1022 = vadd.f32 %v937, %v1021
    %v1023 = vpop.f32.mrb[0].mxu0
    %1024 = vmatprep.mubr.f32.mxu0 %v700
    %1025 = vmatmul.mubr.f32.gmra.mrb[0].mxu0 %v684
    %v1026 = vpop.f32.mrb[0].mxu0
    %v1027 = vadd.f32 %v942, %v1026
    %v1028 = vpop.f32.mrb[0].mxu0
    %1029 = vmatprep.mubr.f32.mxu0 %v701
    %1030 = vmatmul.mubr.f32.gmra.mrb[0].mxu0 %v685
    %v1031 = vpop.f32.mrb[0].mxu0
    %v1032 = vadd.f32 %v947, %v1031
    %v1033 = vpop.f32.mrb[0].mxu0
    %1034 = vmatprep.mubr.f32.mxu0 %v702
    %1035 = vmatmul.mubr.f32.gmra.mrb[0].mxu0 %v686
    %v1036 = vpop.f32.mrb[0].mxu0
    %v1037 = vadd.f32 %v952, %v1036
    %v1038 = vpop.f32.mrb[0].mxu0
    %1039 = vdwg.mxu0
    %1040 = vmatprep.subr.mxu0 0.0
    %1041 = vmatpush1.msra.mxu0 %v815
    %1042 = vmatprep.subr.mxu0 0.0
    %1043 = vmatpush1.msra.mxu0 %v816
    %1044 = vmatprep.subr.mxu0 0.0
    %1045 = vmatpush1.msra.mxu0 %v817
    %1046 = vmatprep.subr.mxu0 0.0
    %1047 = vmatpush1.msra.mxu0 %v818
    %1048 = vmatprep.subr.mxu0 0.0
    %1049 = vmatpush1.msra.mxu0 %v819
    %1050 = vmatprep.subr.mxu0 0.0
    %1051 = vmatpush1.msra.mxu0 %v820
    %1052 = vmatprep.subr.mxu0 0.0
    %1053 = vmatpush1.msra.mxu0 %v821
    %1054 = vmatprep.subr.mxu0 0.0
    %1055 = vmatpush1.msra.mxu0 %v822
    %1056 = vmatprep.subr.mxu0 0.0
    %1057 = vmatpush1.msra.mxu0 %v823
    %1058 = vmatprep.subr.mxu0 0.0
    %1059 = vmatpush1.msra.mxu0 %v824
    %1060 = vmatprep.subr.mxu0 0.0
    %1061 = vmatpush1.msra.mxu0 %v825
    %1062 = vmatprep.subr.mxu0 0.0
    %1063 = vmatpush1.msra.mxu0 %v826
    %1064 = vmatprep.subr.mxu0 0.0
    %1065 = vmatpush1.msra.mxu0 %v827
    %1066 = vmatprep.subr.mxu0 0.0
    %1067 = vmatpush1.msra.mxu0 %v828
    %1068 = vmatprep.subr.mxu0 0.0
    %1069 = vmatpush1.msra.mxu0 %v829
    %1070 = vmatprep.subr.mxu0 0.0
    %1071 = vmatpush1.msra.mxu0 %v830
    %1072 = vmatprep.subr.mxu0 0.0
    %1073 = vmatpush1.msra.mxu0 %v831
    %1074 = vmatprep.subr.mxu0 0.0
    %1075 = vmatpush1.msra.mxu0 %v832
    %1076 = vmatprep.subr.mxu0 0.0
    %1077 = vmatpush1.msra.mxu0 %v833
    %1078 = vmatprep.subr.mxu0 0.0
    %1079 = vmatpush1.msra.mxu0 %v834
    %1080 = vmatprep.subr.mxu0 0.0
    %1081 = vmatpush1.msra.mxu0 %v835
    %1082 = vmatprep.subr.mxu0 0.0
    %1083 = vmatpush1.msra.mxu0 %v836
    %1084 = vmatprep.subr.mxu0 0.0
    %1085 = vmatpush1.msra.mxu0 %v837
    %1086 = vmatprep.subr.mxu0 0.0
    %1087 = vmatpush1.msra.mxu0 %v838
    %1088 = vmatprep.subr.mxu0 0.0
    %1089 = vmatpush1.msra.mxu0 %v839
    %1090 = vmatprep.subr.mxu0 0.0
    %1091 = vmatpush1.msra.mxu0 %v840
    %1092 = vmatprep.subr.mxu0 0.0
    %1093 = vmatpush1.msra.mxu0 %v841
    %1094 = vmatprep.subr.mxu0 0.0
    %1095 = vmatpush1.msra.mxu0 %v842
    %1096 = vmatprep.subr.mxu0 0.0
    %1097 = vmatpush1.msra.mxu0 %v843
    %1098 = vmatprep.subr.mxu0 0.0
    %1099 = vmatpush1.msra.mxu0 %v844
    %1100 = vmatprep.subr.mxu0 0.0
    %1101 = vmatpush1.msra.mxu0 %v845
    %1102 = vmatprep.subr.mxu0 0.0
    %1103 = vmatpush1.msra.mxu0 %v846
    %1104 = vmatprep.mubr.f32.mxu0 %v731
    %1105 = vmatmul.mubr.f32.gmra.mrb[0].mxu0 %v715
    %v1106 = vpop.f32.mrb[0].mxu0
    %v1107 = vadd.f32 %v1022, %v1106
    %v1108 = vpop.f32.mrb[0].mxu0
    %1109 = vmatprep.mubr.f32.mxu0 %v732
    %1110 = vmatmul.mubr.f32.gmra.mrb[0].mxu0 %v716
    %v1111 = vpop.f32.mrb[0].mxu0
    %v1112 = vadd.f32 %v1027, %v1111
    %v1113 = vpop.f32.mrb[0].mxu0
    %1114 = vmatprep.mubr.f32.mxu0 %v733
    %1115 = vmatmul.mubr.f32.gmra.mrb[0].mxu0 %v717
    %v1116 = vpop.f32.mrb[0].mxu0
    %v1117 = vadd.f32 %v1032, %v1116
    %v1118 = vpop.f32.mrb[0].mxu0
    %1119 = vmatprep.mubr.f32.mxu0 %v734
    %1120 = vmatmul.mubr.f32.gmra.mrb[0].mxu0 %v718
    %v1121 = vpop.f32.mrb[0].mxu0
    %v1122 = vadd.f32 %v1037, %v1121
    %v1123 = vpop.f32.mrb[0].mxu0
    %1124 = vdwg.mxu0
    %1125 = vmatprep.subr.mxu0 0.0
    %1126 = vmatpush1.msra.mxu0 %v847
    %1127 = vmatprep.subr.mxu0 0.0
    %1128 = vmatpush1.msra.mxu0 %v848
    %1129 = vmatprep.subr.mxu0 0.0
    %1130 = vmatpush1.msra.mxu0 %v849
    %1131 = vmatprep.subr.mxu0 0.0
    %1132 = vmatpush1.msra.mxu0 %v850
    %1133 = vmatprep.subr.mxu0 0.0
    %1134 = vmatpush1.msra.mxu0 %v851
    %1135 = vmatprep.subr.mxu0 0.0
    %1136 = vmatpush1.msra.mxu0 %v852
    %1137 = vmatprep.subr.mxu0 0.0
    %1138 = vmatpush1.msra.mxu0 %v853
    %1139 = vmatprep.subr.mxu0 0.0
    %1140 = vmatpush1.msra.mxu0 %v854
    %1141 = vmatprep.subr.mxu0 0.0
    %1142 = vmatpush1.msra.mxu0 %v855
    %1143 = vmatprep.subr.mxu0 0.0
    %1144 = vmatpush1.msra.mxu0 %v856
    %1145 = vmatprep.subr.mxu0 0.0
    %1146 = vmatpush1.msra.mxu0 %v857
    %1147 = vmatprep.subr.mxu0 0.0
    %1148 = vmatpush1.msra.mxu0 %v858
    %1149 = vmatprep.subr.mxu0 0.0
    %1150 = vmatpush1.msra.mxu0 %v859
    %1151 = vmatprep.subr.mxu0 0.0
    %1152 = vmatpush1.msra.mxu0 %v860
    %1153 = vmatprep.subr.mxu0 0.0
    %1154 = vmatpush1.msra.mxu0 %v861
    %1155 = vmatprep.subr.mxu0 0.0
    %1156 = vmatpush1.msra.mxu0 %v862
    %1157 = vmatprep.subr.mxu0 0.0
    %1158 = vmatpush1.msra.mxu0 0.0
    %1159 = vmatprep.subr.mxu0 0.0
    %1160 = vmatpush1.msra.mxu0 0.0
    %1161 = vmatprep.subr.mxu0 0.0
    %1162 = vmatpush1.msra.mxu0 0.0
    %1163 = vmatprep.subr.mxu0 0.0
    %1164 = vmatpush1.msra.mxu0 0.0
    %1165 = vmatprep.subr.mxu0 0.0
    %1166 = vmatpush1.msra.mxu0 0.0
    %1167 = vmatprep.subr.mxu0 0.0
    %1168 = vmatpush1.msra.mxu0 0.0
    %1169 = vmatprep.subr.mxu0 0.0
    %1170 = vmatpush1.msra.mxu0 0.0
    %1171 = vmatprep.subr.mxu0 0.0
    %1172 = vmatpush1.msra.mxu0 0.0
    %1173 = vmatprep.subr.mxu0 0.0
    %1174 = vmatpush1.msra.mxu0 0.0
    %1175 = vmatprep.subr.mxu0 0.0
    %1176 = vmatpush1.msra.mxu0 0.0
    %1177 = vmatprep.subr.mxu0 0.0
    %1178 = vmatpush1.msra.mxu0 0.0
    %1179 = vmatprep.subr.mxu0 0.0
    %1180 = vmatpush1.msra.mxu0 0.0
    %1181 = vmatprep.subr.mxu0 0.0
    %1182 = vmatpush1.msra.mxu0 0.0
    %1183 = vmatprep.subr.mxu0 0.0
    %1184 = vmatpush1.msra.mxu0 0.0
    %1185 = vmatprep.subr.mxu0 0.0
    %1186 = vmatpush1.msra.mxu0 0.0
    %1187 = vmatprep.subr.mxu0 0.0
    %1188 = vmatpush1.msra.mxu0 0.0
    %1189 = vmatprep.mubr.f32.mxu0 0.0
    %1190 = vmatmul.mubr.f32.gmra.mrb[0].mxu0 %v747
    %v1191 = vpop.f32.mrb[0].mxu0
    %v1192 = vadd.f32 %v1107, %v1191
    %v1193 = vpop.f32.mrb[0].mxu0
    %1194 = vmatprep.mubr.f32.mxu0 0.0
    %1195 = vmatmul.mubr.f32.gmra.mrb[0].mxu0 %v748
    %v1196 = vpop.f32.mrb[0].mxu0
    %v1197 = vadd.f32 %v1112, %v1196
    %v1198 = vpop.f32.mrb[0].mxu0
    %1199 = vmatprep.mubr.f32.mxu0 0.0
    %1200 = vmatmul.mubr.f32.gmra.mrb[0].mxu0 %v749
    %v1201 = vpop.f32.mrb[0].mxu0
    %v1202 = vadd.f32 %v1117, %v1201
    %v1203 = vpop.f32.mrb[0].mxu0
    %1204 = vmatprep.mubr.f32.mxu0 0.0
    %1205 = vmatmul.mubr.f32.gmra.mrb[0].mxu0 %v750
    %v1206 = vpop.f32.mrb[0].mxu0
    %v1207 = vadd.f32 %v1122, %v1206
    %v1208 = vpop.f32.mrb[0].mxu0
    %1209 = vdwg.mxu0
    %vm1210 = vcmp.gt.f32.partialorder %v1192, 0.0
    %vm1211 = vcmp.gt.f32.partialorder %v1197, 0.0
    %vm1212 = vcmp.gt.f32.partialorder %v1202, 0.0
    %vm1213 = vcmp.gt.f32.partialorder %v1207, 0.0
    %v1214 = vmul.f32 %v1192, 0.01
    %v1215 = vmul.f32 %v1197, 0.01
    %v1216 = vmul.f32 %v1202, 0.01
    %v1217 = vmul.f32 %v1207, 0.01
    %v1218 = vsel %vm1210, %v1192, %v1214
    %v1219 = vsel %vm1211, %v1197, %v1215
    %v1220 = vsel %vm1212, %v1202, %v1216
    %v1221 = vsel %vm1213, %v1207, %v1217
    %v1226 = vrot.slane %v99, 7
    %v1227 = vrot.slane %v100, 7
    %v1228 = vsel %vm107, %v1226, %v1227
    %v1229 = vrot.slane %v101, 7
    %v1230 = vsel %vm107, %v1227, %v1229
    %v1231 = vrot.slane %v102, 7
    %v1232 = vsel %vm107, %v1229, %v1231
    %v1237 = vsel %vm107, 0.0, %v1226
    %v1238 = vsel %vm128, %v1237, 0.0
    %v1239 = vsel %vm129, %v1228, 0.0
    %v1240 = vsel %vm130, %v1230, 0.0
    %v1241 = vsel %vm131, %v1232, 0.0
    %1246 = vrot.lane.b32.xlu0 %v1238, 40
    %v1247 = vpop.permute.xlu0 %1246
    %1248 = vrot.lane.b32.xlu0 %v1239, 40
    %v1249 = vpop.permute.xlu0 %1248
    %1250 = vrot.lane.b32.xlu0 %v1240, 40
    %v1251 = vpop.permute.xlu0 %1250
    %1252 = vrot.lane.b32.xlu0 %v1241, 40
    %v1253 = vpop.permute.xlu0 %1252
    %vm1258 = vcmask 326656
    %v1259 = vsel %vm1258, %v99, %v1247
    %v1260 = vsel %vm1258, %v100, %v1249
    %v1261 = vsel %vm1258, %v101, %v1251
    %v1262 = vsel %vm1258, %v102, %v1253
    %v1263 = vld [vmem:[%s6] sm:$0xff]
    %v1264 = vld [vmem:[%s6 + $0x8] sm:$0xff]
    %v1265 = vld [vmem:[%s6 + $0x10] sm:$0xff]
    %v1266 = vld [vmem:[%s6 + $0x18] sm:$0xff]
    %v1267 = vld [vmem:[%s6 + $0x20] sm:$0xff]
    %v1268 = vld [vmem:[%s6 + $0x28] sm:$0xff]
    %v1269 = vld [vmem:[%s6 + $0x30] sm:$0xff]
    %v1270 = vld [vmem:[%s6 + $0x38] sm:$0xff]
    %v1271 = vld [vmem:[%s6 + $0x40] sm:$0xff]
    %v1272 = vld [vmem:[%s6 + $0x48] sm:$0xff]
    %v1273 = vld [vmem:[%s7] sm:$0x1]
    %v1275 = vlaneseq
    %v1276 = vshrl.u32 %v1275, 7
    %v1277 = vsub.s32 0, %v1276
    %v1278 = vrot.slane %v1273, %v1277
    %v1281 = vsel %vm456, %v1259, 0
    %v1284 = vsel %vm456, %v1260, 0
    %v1287 = vsel %vm456, %v1261, 0
    %v1290 = vsel %vm456, %v1262, 0
    %1292 = vmatprep.subr.mxu0 0.0
    %1293 = vmatpush1.msra.mxu0 %v1263
    %1294 = vmatprep.subr.mxu0 0.0
    %1295 = vmatpush1.msra.mxu0 %v1264
    %1296 = vmatprep.subr.mxu0 0.0
    %1297 = vmatpush1.msra.mxu0 %v1265
    %1298 = vmatprep.subr.mxu0 0.0
    %1299 = vmatpush1.msra.mxu0 %v1266
    %1300 = vmatprep.subr.mxu0 0.0
    %1301 = vmatpush1.msra.mxu0 %v1267
    %1302 = vmatprep.subr.mxu0 0.0
    %1303 = vmatpush1.msra.mxu0 %v1268
    %1304 = vmatprep.subr.mxu0 0.0
    %1305 = vmatpush1.msra.mxu0 %v1269
    %1306 = vmatprep.subr.mxu0 0.0
    %1307 = vmatpush1.msra.mxu0 %v1270
    %1308 = vmatprep.subr.mxu0 0.0
    %1309 = vmatpush1.msra.mxu0 %v1271
    %1310 = vmatprep.subr.mxu0 0.0
    %1311 = vmatpush1.msra.mxu0 %v1272
    %1312 = vmatprep.subr.mxu0 0.0
    %1313 = vmatpush1.msra.mxu0 0.0
    %1314 = vmatprep.subr.mxu0 0.0
    %1315 = vmatpush1.msra.mxu0 0.0
    %1316 = vmatprep.subr.mxu0 0.0
    %1317 = vmatpush1.msra.mxu0 0.0
    %1318 = vmatprep.subr.mxu0 0.0
    %1319 = vmatpush1.msra.mxu0 0.0
    %1320 = vmatprep.subr.mxu0 0.0
    %1321 = vmatpush1.msra.mxu0 0.0
    %1322 = vmatprep.subr.mxu0 0.0
    %1323 = vmatpush1.msra.mxu0 0.0
    %1324 = vmatprep.subr.mxu0 0.0
    %1325 = vmatpush1.msra.mxu0 0.0
    %1326 = vmatprep.subr.mxu0 0.0
    %1327 = vmatpush1.msra.mxu0 0.0
    %1328 = vmatprep.subr.mxu0 0.0
    %1329 = vmatpush1.msra.mxu0 0.0
    %1330 = vmatprep.subr.mxu0 0.0
    %1331 = vmatpush1.msra.mxu0 0.0
    %1332 = vmatprep.subr.mxu0 0.0
    %1333 = vmatpush1.msra.mxu0 0.0
    %1334 = vmatprep.subr.mxu0 0.0
    %1335 = vmatpush1.msra.mxu0 0.0
    %1336 = vmatprep.subr.mxu0 0.0
    %1337 = vmatpush1.msra.mxu0 0.0
    %1338 = vmatprep.subr.mxu0 0.0
    %1339 = vmatpush1.msra.mxu0 0.0
    %1340 = vmatprep.subr.mxu0 0.0
    %1341 = vmatpush1.msra.mxu0 0.0
    %1342 = vmatprep.subr.mxu0 0.0
    %1343 = vmatpush1.msra.mxu0 0.0
    %1344 = vmatprep.subr.mxu0 0.0
    %1345 = vmatpush1.msra.mxu0 0.0
    %1346 = vmatprep.subr.mxu0 0.0
    %1347 = vmatpush1.msra.mxu0 0.0
    %1348 = vmatprep.subr.mxu0 0.0
    %1349 = vmatpush1.msra.mxu0 0.0
    %1350 = vmatprep.subr.mxu0 0.0
    %1351 = vmatpush1.msra.mxu0 0.0
    %1352 = vmatprep.subr.mxu0 0.0
    %1353 = vmatpush1.msra.mxu0 0.0
    %1354 = vmatprep.subr.mxu0 0.0
    %1355 = vmatpush1.msra.mxu0 0.0
    %1356 = vmatprep.mubr.f32.mxu0 0.0
    %1357 = vmatmul.mubr.f32.gmra.mrb[0].mxu0 %v1281
    %v1358 = vpop.f32.mrb[0].mxu0
    %v1359 = vadd.f32 %v1278, %v1358
    %v1360 = vpop.f32.mrb[0].mxu0
    %1361 = vmatprep.mubr.f32.mxu0 0.0
    %1362 = vmatmul.mubr.f32.gmra.mrb[0].mxu0 %v1284
    %v1363 = vpop.f32.mrb[0].mxu0
    %v1364 = vadd.f32 %v1278, %v1363
    %v1365 = vpop.f32.mrb[0].mxu0
    %1366 = vmatprep.mubr.f32.mxu0 0.0
    %1367 = vmatmul.mubr.f32.gmra.mrb[0].mxu0 %v1287
    %v1368 = vpop.f32.mrb[0].mxu0
    %v1369 = vadd.f32 %v1278, %v1368
    %v1370 = vpop.f32.mrb[0].mxu0
    %1371 = vmatprep.mubr.f32.mxu0 0.0
    %1372 = vmatmul.mubr.f32.gmra.mrb[0].mxu0 %v1290
    %v1373 = vpop.f32.mrb[0].mxu0
    %v1374 = vadd.f32 %v1278, %v1373
    %v1375 = vpop.f32.mrb[0].mxu0
    %1376 = vdwg.mxu0
    %vm1377 = vcmp.gt.f32.partialorder %v1359, 0.0
    %vm1378 = vcmp.gt.f32.partialorder %v1364, 0.0
    %vm1379 = vcmp.gt.f32.partialorder %v1369, 0.0
    %vm1380 = vcmp.gt.f32.partialorder %v1374, 0.0
    %v1381 = vmul.f32 %v1359, 0.01
    %v1382 = vmul.f32 %v1364, 0.01
    %v1383 = vmul.f32 %v1369, 0.01
    %v1384 = vmul.f32 %v1374, 0.01
    %v1385 = vsel %vm1377, %v1359, %v1381
    %v1386 = vsel %vm1378, %v1364, %v1382
    %v1387 = vsel %vm1379, %v1369, %v1383
    %v1388 = vsel %vm1380, %v1374, %v1384
    %v1393 = vrot.slane %v1385, 7
    %v1394 = vrot.slane %v1386, 7
    %v1395 = vsel %vm107, %v1393, %v1394
    %v1396 = vrot.slane %v1387, 7
    %v1397 = vsel %vm107, %v1394, %v1396
    %v1398 = vrot.slane %v1388, 7
    %v1399 = vsel %vm107, %v1396, %v1398
    %v1404 = vsel %vm107, 0.0, %v1393
    %v1405 = vsel %vm128, %v1404, 0.0
    %v1406 = vsel %vm129, %v1395, 0.0
    %v1407 = vsel %vm130, %v1397, 0.0
    %v1408 = vsel %vm131, %v1399, 0.0
    %v1409 = vld [vmem:[%s8] sm:$0xff]
    %v1410 = vld [vmem:[%s8 + $0x8] sm:$0xff]
    %v1411 = vld [vmem:[%s8 + $0x10] sm:$0xff]
    %v1412 = vld [vmem:[%s8 + $0x18] sm:$0xff]
    %v1413 = vld [vmem:[%s8 + $0x20] sm:$0xff]
    %v1414 = vld [vmem:[%s8 + $0x28] sm:$0xff]
    %v1415 = vld [vmem:[%s8 + $0x30] sm:$0xff]
    %v1416 = vld [vmem:[%s8 + $0x38] sm:$0xff]
    %v1417 = vld [vmem:[%s8 + $0x40] sm:$0xff]
    %v1418 = vld [vmem:[%s8 + $0x48] sm:$0xff]
    %v1419 = vld [vmem:[%s8 + $0x50] sm:$0xff]
    %v1420 = vld [vmem:[%s8 + $0x58] sm:$0xff]
    %v1421 = vld [vmem:[%s8 + $0x60] sm:$0xff]
    %v1422 = vld [vmem:[%s8 + $0x68] sm:$0xff]
    %v1423 = vld [vmem:[%s8 + $0x70] sm:$0xff]
    %v1424 = vld [vmem:[%s8 + $0x78] sm:$0xff]
    %v1425 = vld [vmem:[%s8 + $0x80] sm:$0xff]
    %v1426 = vld [vmem:[%s8 + $0x88] sm:$0xff]
    %v1427 = vld [vmem:[%s8 + $0x90] sm:$0xff]
    %v1428 = vld [vmem:[%s8 + $0x98] sm:$0xff]
    %v1429 = vld [vmem:[%s8 + $0xa0] sm:$0xff]
    %v1430 = vld [vmem:[%s8 + $0xa8] sm:$0xff]
    %v1431 = vld [vmem:[%s8 + $0xb0] sm:$0xff]
    %v1432 = vld [vmem:[%s8 + $0xb8] sm:$0xff]
    %v1433 = vld [vmem:[%s8 + $0xc0] sm:$0xff]
    %v1434 = vld [vmem:[%s8 + $0xc8] sm:$0xff]
    %v1435 = vld [vmem:[%s8 + $0xd0] sm:$0xff]
    %v1436 = vld [vmem:[%s8 + $0xd8] sm:$0xff]
    %v1437 = vld [vmem:[%s8 + $0xe0] sm:$0xff]
    %v1438 = vld [vmem:[%s8 + $0xe8] sm:$0xff]
    %v1439 = vld [vmem:[%s8 + $0xf0] sm:$0xff]
    %v1440 = vld [vmem:[%s8 + $0xf8] sm:$0xff]
    %v1441 = vld [vmem:[%s9] sm:$0x1]
    %v1443 = vlaneseq
    %v1444 = vshrl.u32 %v1443, 7
    %v1445 = vsub.s32 0, %v1444
    %v1446 = vrot.slane %v1441, %v1445
    %1448 = vmatprep.subr.mxu0 0.0
    %1449 = vmatpush1.msra.mxu0 %v1409
    %1450 = vmatprep.subr.mxu0 0.0
    %1451 = vmatpush1.msra.mxu0 %v1410
    %1452 = vmatprep.subr.mxu0 0.0
    %1453 = vmatpush1.msra.mxu0 %v1411
    %1454 = vmatprep.subr.mxu0 0.0
    %1455 = vmatpush1.msra.mxu0 %v1412
    %1456 = vmatprep.subr.mxu0 0.0
    %1457 = vmatpush1.msra.mxu0 %v1413
    %1458 = vmatprep.subr.mxu0 0.0
    %1459 = vmatpush1.msra.mxu0 %v1414
    %1460 = vmatprep.subr.mxu0 0.0
    %1461 = vmatpush1.msra.mxu0 %v1415
    %1462 = vmatprep.subr.mxu0 0.0
    %1463 = vmatpush1.msra.mxu0 %v1416
    %1464 = vmatprep.subr.mxu0 0.0
    %1465 = vmatpush1.msra.mxu0 %v1417
    %1466 = vmatprep.subr.mxu0 0.0
    %1467 = vmatpush1.msra.mxu0 %v1418
    %1468 = vmatprep.subr.mxu0 0.0
    %1469 = vmatpush1.msra.mxu0 %v1419
    %1470 = vmatprep.subr.mxu0 0.0
    %1471 = vmatpush1.msra.mxu0 %v1420
    %1472 = vmatprep.subr.mxu0 0.0
    %1473 = vmatpush1.msra.mxu0 %v1421
    %1474 = vmatprep.subr.mxu0 0.0
    %1475 = vmatpush1.msra.mxu0 %v1422
    %1476 = vmatprep.subr.mxu0 0.0
    %1477 = vmatpush1.msra.mxu0 %v1423
    %1478 = vmatprep.subr.mxu0 0.0
    %1479 = vmatpush1.msra.mxu0 %v1424
    %1480 = vmatprep.subr.mxu0 0.0
    %1481 = vmatpush1.msra.mxu0 %v1425
    %1482 = vmatprep.subr.mxu0 0.0
    %1483 = vmatpush1.msra.mxu0 %v1426
    %1484 = vmatprep.subr.mxu0 0.0
    %1485 = vmatpush1.msra.mxu0 %v1427
    %1486 = vmatprep.subr.mxu0 0.0
    %1487 = vmatpush1.msra.mxu0 %v1428
    %1488 = vmatprep.subr.mxu0 0.0
    %1489 = vmatpush1.msra.mxu0 %v1429
    %1490 = vmatprep.subr.mxu0 0.0
    %1491 = vmatpush1.msra.mxu0 %v1430
    %1492 = vmatprep.subr.mxu0 0.0
    %1493 = vmatpush1.msra.mxu0 %v1431
    %1494 = vmatprep.subr.mxu0 0.0
    %1495 = vmatpush1.msra.mxu0 %v1432
    %1496 = vmatprep.subr.mxu0 0.0
    %1497 = vmatpush1.msra.mxu0 %v1433
    %1498 = vmatprep.subr.mxu0 0.0
    %1499 = vmatpush1.msra.mxu0 %v1434
    %1500 = vmatprep.subr.mxu0 0.0
    %1501 = vmatpush1.msra.mxu0 %v1435
    %1502 = vmatprep.subr.mxu0 0.0
    %1503 = vmatpush1.msra.mxu0 %v1436
    %1504 = vmatprep.subr.mxu0 0.0
    %1505 = vmatpush1.msra.mxu0 %v1437
    %1506 = vmatprep.subr.mxu0 0.0
    %1507 = vmatpush1.msra.mxu0 %v1438
    %1508 = vmatprep.subr.mxu0 0.0
    %1509 = vmatpush1.msra.mxu0 %v1439
    %1510 = vmatprep.subr.mxu0 0.0
    %1511 = vmatpush1.msra.mxu0 %v1440
    %1512 = vmatprep.mubr.f32.mxu0 %v1405
    %1513 = vmatmul.mubr.f32.gmra.mrb[0].mxu0 %v1385
    %v1514 = vpop.f32.mrb[0].mxu0
    %v1515 = vadd.f32 %v1446, %v1514
    %v1516 = vpop.f32.mrb[0].mxu0
    %1517 = vmatprep.mubr.f32.mxu0 %v1406
    %1518 = vmatmul.mubr.f32.gmra.mrb[0].mxu0 %v1386
    %v1519 = vpop.f32.mrb[0].mxu0
    %v1520 = vadd.f32 %v1446, %v1519
    %v1521 = vpop.f32.mrb[0].mxu0
    %1522 = vmatprep.mubr.f32.mxu0 %v1407
    %1523 = vmatmul.mubr.f32.gmra.mrb[0].mxu0 %v1387
    %v1524 = vpop.f32.mrb[0].mxu0
    %v1525 = vadd.f32 %v1446, %v1524
    %v1526 = vpop.f32.mrb[0].mxu0
    %1527 = vmatprep.mubr.f32.mxu0 %v1408
    %1528 = vmatmul.mubr.f32.gmra.mrb[0].mxu0 %v1388
    %v1529 = vpop.f32.mrb[0].mxu0
    %v1530 = vadd.f32 %v1446, %v1529
    %v1531 = vpop.f32.mrb[0].mxu0
    %1532 = vdwg.mxu0
    %vm1533 = vcmp.gt.f32.partialorder %v1515, 0.0
    %vm1534 = vcmp.gt.f32.partialorder %v1520, 0.0
    %vm1535 = vcmp.gt.f32.partialorder %v1525, 0.0
    %vm1536 = vcmp.gt.f32.partialorder %v1530, 0.0
    %v1537 = vmul.f32 %v1515, 0.01
    %v1538 = vmul.f32 %v1520, 0.01
    %v1539 = vmul.f32 %v1525, 0.01
    %v1540 = vmul.f32 %v1530, 0.01
    %v1541 = vsel %vm1533, %v1515, %v1537
    %v1542 = vsel %vm1534, %v1520, %v1538
    %v1543 = vsel %vm1535, %v1525, %v1539
    %v1544 = vsel %vm1536, %v1530, %v1540
    %v1545 = vsel %vm392, %v1541, -inf
    %v1546 = vsel %vm392, %v1542, -inf
    %v1547 = vmax.f32 %v1545, %v1546
    %v1548 = vrot.slane %v1547, 4
    %v1549 = vmax.f32 %v1547, %v1548
    %v1550 = vrot.slane %v1549, 2
    %v1551 = vmax.f32 %v1549, %v1550
    %v1552 = vrot.slane %v1551, 1
    %v1553 = vmax.f32 %v1551, %v1552
    %v1554 = vsel %vm392, %v1218, -inf
    %v1555 = vsel %vm392, %v1219, -inf
    %v1556 = vmax.f32 %v1554, %v1555
    %v1557 = vrot.slane %v1556, 4
    %v1558 = vmax.f32 %v1556, %v1557
    %v1559 = vrot.slane %v1558, 2
    %v1560 = vmax.f32 %v1558, %v1559
    %v1561 = vrot.slane %v1560, 1
    %v1562 = vmax.f32 %v1560, %v1561
    %1565 = vrot.lane.b32.xlu0 %v1218, 64
    %v1566 = vpop.permute.xlu0 %1565
    %1567 = vrot.lane.b32.xlu0 %v1219, 64
    %v1568 = vpop.permute.xlu0 %1567
    %v1571 = vadd.f32 %v1553, %v1566
    %v1572 = vadd.f32 %v1553, %v1568
    %v1573 = vsub.f32 0.0, %v1571
    %v1574 = vsub.f32 0.0, %v1572
    %v1575 = vmul.f32 %v1573, 1.442695
    %v1576 = vpow.pop %v1575
    %v1577 = vmul.f32 %v1574, 1.442695
    %v1578 = vpow.pop %v1577
    %v1579 = vadd.f32 %v1576, 1.0
    %v1580 = vadd.f32 %v1578, 1.0
    %v1581 = vrcp.pop %v1579
    %v1582 = vmul.f32 1.0, %v1581
    %v1583 = vrcp.pop %v1580
    %v1584 = vmul.f32 1.0, %v1583
    %v1585 = vmul.f32 %v1218, %v1582
    %v1586 = vmul.f32 %v1219, %v1584
    %1589 = vrot.lane.b32.xlu0 %v1541, 64
    %v1590 = vpop.permute.xlu0 %1589
    %1591 = vrot.lane.b32.xlu0 %v1542, 64
    %v1592 = vpop.permute.xlu0 %1591
    %v1595 = vadd.f32 %v1562, %v1590
    %v1596 = vadd.f32 %v1562, %v1592
    %v1597 = vsub.f32 0.0, %v1595
    %v1598 = vsub.f32 0.0, %v1596
    %v1599 = vmul.f32 %v1597, 1.442695
    %v1600 = vpow.pop %v1599
    %v1601 = vmul.f32 %v1598, 1.442695
    %v1602 = vpow.pop %v1601
    %v1603 = vadd.f32 %v1600, 1.0
    %v1604 = vadd.f32 %v1602, 1.0
    %v1605 = vrcp.pop %v1603
    %v1606 = vmul.f32 1.0, %v1605
    %v1607 = vrcp.pop %v1604
    %v1608 = vmul.f32 1.0, %v1607
    %v1609 = vmul.f32 %v1541, %v1606
    %v1610 = vmul.f32 %v1542, %v1608
    %v1611 = vsel %vm392, %v1585, -inf
    %v1612 = vsel %vm392, %v1586, -inf
    %v1613 = vmax.f32 %v1611, %v1612
    %v1614 = vrot.slane %v1613, 4
    %v1615 = vmax.f32 %v1613, %v1614
    %v1616 = vrot.slane %v1615, 2
    %v1617 = vmax.f32 %v1615, %v1616
    %v1618 = vrot.slane %v1617, 1
    %v1619 = vmax.f32 %v1617, %v1618
    %v1620 = vsel %vm392, %v1609, -inf
    %v1621 = vsel %vm392, %v1610, -inf
    %v1622 = vmax.f32 %v1620, %v1621
    %v1623 = vrot.slane %v1622, 4
    %v1624 = vmax.f32 %v1622, %v1623
    %v1625 = vrot.slane %v1624, 2
    %v1626 = vmax.f32 %v1624, %v1625
    %v1627 = vrot.slane %v1626, 1
    %v1628 = vmax.f32 %v1626, %v1627
    %1630 = vrot.lane.b32.xlu0 %v1628, 64
    %v1631 = vpop.permute.xlu0 %1630
    %v1633 = vsel %vm392, %v1619, %v1631
    %v1634 = vsel %vm392, %v1543, -inf
    %v1635 = vsel %vm392, %v1544, -inf
    %v1636 = vmax.f32 %v1634, %v1635
    %v1637 = vrot.slane %v1636, 4
    %v1638 = vmax.f32 %v1636, %v1637
    %v1639 = vrot.slane %v1638, 2
    %v1640 = vmax.f32 %v1638, %v1639
    %v1641 = vrot.slane %v1640, 1
    %v1642 = vmax.f32 %v1640, %v1641
    %v1643 = vsel %vm392, %v1220, -inf
    %v1644 = vsel %vm392, %v1221, -inf
    %v1645 = vmax.f32 %v1643, %v1644
    %v1646 = vrot.slane %v1645, 4
    %v1647 = vmax.f32 %v1645, %v1646
    %v1648 = vrot.slane %v1647, 2
    %v1649 = vmax.f32 %v1647, %v1648
    %v1650 = vrot.slane %v1649, 1
    %v1651 = vmax.f32 %v1649, %v1650
    %1654 = vrot.lane.b32.xlu0 %v1220, 64
    %v1655 = vpop.permute.xlu0 %1654
    %1656 = vrot.lane.b32.xlu0 %v1221, 64
    %v1657 = vpop.permute.xlu0 %1656
    %v1660 = vadd.f32 %v1642, %v1655
    %v1661 = vadd.f32 %v1642, %v1657
    %v1662 = vsub.f32 0.0, %v1660
    %v1663 = vsub.f32 0.0, %v1661
    %v1664 = vmul.f32 %v1662, 1.442695
    %v1665 = vpow.pop %v1664
    %v1666 = vmul.f32 %v1663, 1.442695
    %v1667 = vpow.pop %v1666
    %v1668 = vadd.f32 %v1665, 1.0
    %v1669 = vadd.f32 %v1667, 1.0
    %v1670 = vrcp.pop %v1668
    %v1671 = vmul.f32 1.0, %v1670
    %v1672 = vrcp.pop %v1669
    %v1673 = vmul.f32 1.0, %v1672
    %v1674 = vmul.f32 %v1220, %v1671
    %v1675 = vmul.f32 %v1221, %v1673
    %1678 = vrot.lane.b32.xlu0 %v1543, 64
    %v1679 = vpop.permute.xlu0 %1678
    %1680 = vrot.lane.b32.xlu0 %v1544, 64
    %v1681 = vpop.permute.xlu0 %1680
    %v1684 = vadd.f32 %v1651, %v1679
    %v1685 = vadd.f32 %v1651, %v1681
    %v1686 = vsub.f32 0.0, %v1684
    %v1687 = vsub.f32 0.0, %v1685
    %v1688 = vmul.f32 %v1686, 1.442695
    %v1689 = vpow.pop %v1688
    %v1690 = vmul.f32 %v1687, 1.442695
    %v1691 = vpow.pop %v1690
    %v1692 = vadd.f32 %v1689, 1.0
    %v1693 = vadd.f32 %v1691, 1.0
    %v1694 = vrcp.pop %v1692
    %v1695 = vmul.f32 1.0, %v1694
    %v1696 = vrcp.pop %v1693
    %v1697 = vmul.f32 1.0, %v1696
    %v1698 = vmul.f32 %v1543, %v1695
    %v1699 = vmul.f32 %v1544, %v1697
    %v1700 = vsel %vm392, %v1674, -inf
    %v1701 = vsel %vm392, %v1675, -inf
    %v1702 = vmax.f32 %v1700, %v1701
    %v1703 = vrot.slane %v1702, 4
    %v1704 = vmax.f32 %v1702, %v1703
    %v1705 = vrot.slane %v1704, 2
    %v1706 = vmax.f32 %v1704, %v1705
    %v1707 = vrot.slane %v1706, 1
    %v1708 = vmax.f32 %v1706, %v1707
    %v1709 = vsel %vm392, %v1698, -inf
    %v1710 = vsel %vm392, %v1699, -inf
    %v1711 = vmax.f32 %v1709, %v1710
    %v1712 = vrot.slane %v1711, 4
    %v1713 = vmax.f32 %v1711, %v1712
    %v1714 = vrot.slane %v1713, 2
    %v1715 = vmax.f32 %v1713, %v1714
    %v1716 = vrot.slane %v1715, 1
    %v1717 = vmax.f32 %v1715, %v1716
    %1719 = vrot.lane.b32.xlu0 %v1717, 64
    %v1720 = vpop.permute.xlu0 %1719
    %v1722 = vsel %vm392, %v1708, %v1720
    %v1724 = vrot.slane %v1722, 7
    %v1726 = vsel %vm107, %v1633, %v1724
    %v1727 = vld [vmem:[%s10] sm:$0xff]
    %v1728 = vld [vmem:[%s10 + $0x8] sm:$0xff]
    %v1729 = vld [vmem:[%s10 + $0x10] sm:$0xff]
    %v1730 = vld [vmem:[%s10 + $0x18] sm:$0xff]
    %v1731 = vld [vmem:[%s10 + $0x20] sm:$0xff]
    %v1732 = vld [vmem:[%s10 + $0x28] sm:$0xff]
    %v1733 = vld [vmem:[%s10 + $0x30] sm:$0xff]
    %v1734 = vld [vmem:[%s10 + $0x38] sm:$0xff]
    %v1735 = vld [vmem:[%s10 + $0x40] sm:$0xff]
    %v1736 = vld [vmem:[%s10 + $0x48] sm:$0xff]
    %v1737 = vld [vmem:[%s10 + $0x50] sm:$0xff]
    %v1738 = vld [vmem:[%s10 + $0x58] sm:$0xff]
    %v1739 = vld [vmem:[%s10 + $0x60] sm:$0xff]
    %v1740 = vld [vmem:[%s10 + $0x68] sm:$0xff]
    %v1741 = vld [vmem:[%s10 + $0x70] sm:$0xff]
    %v1742 = vld [vmem:[%s10 + $0x78] sm:$0xff]
    %v1743 = vld [vmem:[%s11] sm:$0x1]
    %v1745 = vlaneseq
    %v1746 = vshrl.u32 %v1745, 7
    %v1747 = vsub.s32 0, %v1746
    %v1748 = vrot.slane %v1743, %v1747
    %1750 = vmatprep.subr.mxu0 0.0
    %1751 = vmatpush1.msra.mxu0 %v1727
    %1752 = vmatprep.subr.mxu0 0.0
    %1753 = vmatpush1.msra.mxu0 %v1728
    %1754 = vmatprep.subr.mxu0 0.0
    %1755 = vmatpush1.msra.mxu0 %v1729
    %1756 = vmatprep.subr.mxu0 0.0
    %1757 = vmatpush1.msra.mxu0 %v1730
    %1758 = vmatprep.subr.mxu0 0.0
    %1759 = vmatpush1.msra.mxu0 %v1731
    %1760 = vmatprep.subr.mxu0 0.0
    %1761 = vmatpush1.msra.mxu0 %v1732
    %1762 = vmatprep.subr.mxu0 0.0
    %1763 = vmatpush1.msra.mxu0 %v1733
    %1764 = vmatprep.subr.mxu0 0.0
    %1765 = vmatpush1.msra.mxu0 %v1734
    %1766 = vmatprep.subr.mxu0 0.0
    %1767 = vmatpush1.msra.mxu0 %v1735
    %1768 = vmatprep.subr.mxu0 0.0
    %1769 = vmatpush1.msra.mxu0 %v1736
    %1770 = vmatprep.subr.mxu0 0.0
    %1771 = vmatpush1.msra.mxu0 %v1737
    %1772 = vmatprep.subr.mxu0 0.0
    %1773 = vmatpush1.msra.mxu0 %v1738
    %1774 = vmatprep.subr.mxu0 0.0
    %1775 = vmatpush1.msra.mxu0 %v1739
    %1776 = vmatprep.subr.mxu0 0.0
    %1777 = vmatpush1.msra.mxu0 %v1740
    %1778 = vmatprep.subr.mxu0 0.0
    %1779 = vmatpush1.msra.mxu0 %v1741
    %1780 = vmatprep.subr.mxu0 0.0
    %1781 = vmatpush1.msra.mxu0 %v1742
    %1782 = vmatprep.subr.mxu0 0.0
    %1783 = vmatpush1.msra.mxu0 0.0
    %1784 = vmatprep.subr.mxu0 0.0
    %1785 = vmatpush1.msra.mxu0 0.0
    %1786 = vmatprep.subr.mxu0 0.0
    %1787 = vmatpush1.msra.mxu0 0.0
    %1788 = vmatprep.subr.mxu0 0.0
    %1789 = vmatpush1.msra.mxu0 0.0
    %1790 = vmatprep.subr.mxu0 0.0
    %1791 = vmatpush1.msra.mxu0 0.0
    %1792 = vmatprep.subr.mxu0 0.0
    %1793 = vmatpush1.msra.mxu0 0.0
    %1794 = vmatprep.subr.mxu0 0.0
    %1795 = vmatpush1.msra.mxu0 0.0
    %1796 = vmatprep.subr.mxu0 0.0
    %1797 = vmatpush1.msra.mxu0 0.0
    %1798 = vmatprep.subr.mxu0 0.0
    %1799 = vmatpush1.msra.mxu0 0.0
    %1800 = vmatprep.subr.mxu0 0.0
    %1801 = vmatpush1.msra.mxu0 0.0
    %1802 = vmatprep.subr.mxu0 0.0
    %1803 = vmatpush1.msra.mxu0 0.0
    %1804 = vmatprep.subr.mxu0 0.0
    %1805 = vmatpush1.msra.mxu0 0.0
    %1806 = vmatprep.subr.mxu0 0.0
    %1807 = vmatpush1.msra.mxu0 0.0
    %1808 = vmatprep.subr.mxu0 0.0
    %1809 = vmatpush1.msra.mxu0 0.0
    %1810 = vmatprep.subr.mxu0 0.0
    %1811 = vmatpush1.msra.mxu0 0.0
    %1812 = vmatprep.subr.mxu0 0.0
    %1813 = vmatpush1.msra.mxu0 0.0
    %1814 = vmatprep.mubr.f32.mxu0 0.0
    %1815 = vmatmul.mubr.f32.gmra.mrb[0].mxu0 %v1726
    %v1816 = vpop.f32.mrb[0].mxu0
    %v1817 = vadd.f32 %v1748, %v1816
    %v1818 = vpop.f32.mrb[0].mxu0
    %1819 = vdwg.mxu0
    %vm1820 = vcmask 17408
    %1821 = vst.msk [vmem:[#allocation2] sm:$0x3] %vm1820, %v1817
    // Predicated region
    $region50: #{gc_embed3_forward.1} parent=1 // pred_check
      _
    $region51: #{gc_embed3_forward.1} parent=1 // pred_check_branch
      %1823 = sbr.rel (0) target = $region53
    $region52: #{gc_embed3_forward.1} parent=1 // pred_region
      %s1825 = ssub.s32 32, 32
      %1826 = vsyncadd [#allocation3], %s1825
      %s1828 = sshll.u32 [#allocation2], 4
      %s1829 = int_to_ptr.vmem [resolvable:$true] %s1828
      %1831 = dma.vmem_to_hbm [thread:$0]  %s1829, 32, %s12, [#allocation3]
    $region53: #{gc_embed3_forward.1} parent=1 // pred_fallthru
      _
    // Predicated region
    $region54: #{gc_embed3_forward.1} parent=1 // pred_check
      _
    $region55: #{gc_embed3_forward.1} parent=1 // pred_check_branch
      %1833 = sbr.rel (0) target = $region57
    $region56: #{gc_embed3_forward.1} parent=1 // pred_region
      %1834 = dma.done [#allocation3], 32
    $region57: #{gc_embed3_forward.1} parent=1 // pred_fallthru
      _
    %1835 = vsyncpa [#allocation3], 1

</llo_original>
